<compile_context>
chip_gen: v7x
topology: tpu7x:2x2x1
jax: 0.10.0
libtpu: 0.0.40
codegen_flags: <defaults>
</compile_context>

<pallas_src>
import functools
import math

import jax
import jax.numpy as jnp
from jax.experimental import pallas as pl
from jax.experimental.pallas import tpu as pltpu


# ------------------------------- kernel helpers ------------------------------

def _layer_norm(x, g, b, eps=1e-5):
    mu = jnp.mean(x, axis=-1, keepdims=True)
    var = jnp.mean((x - mu) ** 2, axis=-1, keepdims=True)
    return (x - mu) * jax.lax.rsqrt(var + eps) * g + b


def _gelu_exact(x):
    # nn.GELU() default (approximate='none') -> exact erf form.
    return 0.5 * x * (1.0 + jax.lax.erf(x * (1.0 / math.sqrt(2.0))))


# --------------------------------- the kernel --------------------------------

def gpt2_block_kernel(x_ref,
                      ln1_g_ref, ln1_b_ref,
                      wqkv_ref, bqkv_ref,          # (D, 3D) bf16, (1, 3D) f32
                      wo_ref, bo_ref,              # (D, D)  bf16, (1, D)  f32
                      ln2_g_ref, ln2_b_ref,
                      w1_ref, b1_ref,              # (D, 4D) bf16, (1, 4D) f32
                      w2_ref, b2_ref,              # (4D, D) bf16, (1, D)  f32
                      out_ref,
                      qkv_ref,                     # VMEM scratch (S, 3D) bf16
                      *, n_head, q_tile):
    qi = pl.program_id(1)
    S = x_ref.shape[1]
    D = x_ref.shape[2]
    hd = D // n_head

    # ---- once per batch element: LN1 + fused QKV projection for the full
    # sequence, stored in bf16 scratch (1/sqrt(hd) already folded into q).
    @pl.when(qi == 0)
    def _():
        x_full = x_ref[0]                                             # (S, D) f32
        xn = _layer_norm(x_full, ln1_g_ref[...], ln1_b_ref[...])
        qkv = jnp.dot(xn.astype(jnp.bfloat16), wqkv_ref[...],
                      preferred_element_type=jnp.float32) + bqkv_ref[...]
        qkv_ref[...] = qkv.astype(jnp.bfloat16)

    # ---- current query tile
    row0 = pl.multiple_of(qi * q_tile, q_tile)
    x_t = x_ref[0, pl.ds(row0, q_tile), :]                            # (TQ, D) f32
    q_t = qkv_ref[pl.ds(row0, q_tile), :D]                            # (TQ, D) bf16 (pre-scaled)

    # ---- attention: per head, accumulate straight through Wo (no concat).
    attn = jnp.zeros((q_tile, D), jnp.float32)
    for h in range(n_head):
        sl = slice(h * hd, (h + 1) * hd)
        qh = q_t[:, sl]                                               # (TQ, hd) bf16
        kh = qkv_ref[:, D + h * hd:D + (h + 1) * hd]                  # (S, hd)  bf16
        vh = qkv_ref[:, 2 * D + h * hd:2 * D + (h + 1) * hd]          # (S, hd)  bf16
        # q . k^T without materializing a transpose (NT dot_general).
        s = jax.lax.dot_general(qh, kh, (((1,), (1,)), ((), ())),
                                preferred_element_type=jnp.float32)   # (TQ, S)
        m = jnp.max(s, axis=-1, keepdims=True)
        p = jnp.exp(s - m)
        denom = jnp.sum(p, axis=-1, keepdims=True)                    # (TQ, 1)
        ctx = jnp.dot(p.astype(jnp.bfloat16), vh,
                      preferred_element_type=jnp.float32)             # (TQ, hd)
        ctx = ctx * pl.reciprocal(denom, approx=True)                 # post-matmul rescale (EUP)
        attn = attn + jnp.dot(ctx.astype(jnp.bfloat16), wo_ref[sl, :],
                              preferred_element_type=jnp.float32)     # (TQ, D)

    h1 = x_t + (attn + bo_ref[...])                                   # residual 1 (f32)

    # ---- LN2 + MLP (Linear -> GELU -> Linear), row-tiled.
    h1n = _layer_norm(h1, ln2_g_ref[...], ln2_b_ref[...])
    f = jnp.dot(h1n.astype(jnp.bfloat16), w1_ref[...],
                preferred_element_type=jnp.float32) + b1_ref[...]
    f = _gelu_exact(f)
    f = jnp.dot(f.astype(jnp.bfloat16), w2_ref[...],
                preferred_element_type=jnp.float32) + b2_ref[...]

    out_ref[0] = (h1 + f).astype(out_ref.dtype)                       # residual 2


# --------------------------------- wrapper -----------------------------------

def gpt2_natural_attention_block(x, params, n_head):
    """x: (B, S, D) float32; params follow PyTorch nn.Linear convention (out,in)."""
    (ln1_g, ln1_b, wq, bq, wk, bk, wv, bv, wo, bo,
     ln2_g, ln2_b, w1, b1, w2, b2) = params
    B, S, D = x.shape
    hd = D // n_head
    scale = 1.0 / math.sqrt(hd)
    bf16, f32 = jnp.bfloat16, jnp.float32

    # Pre-transpose / fuse weights in the wrapper (free, once):
    #   wqkv_t: (D, 3D) with the attention scale folded into the q block.
    wqkv_t = jnp.concatenate([wq * scale, wk, wv], axis=0).T.astype(bf16)
    bqkv = jnp.concatenate([bq * scale, bk, bv], axis=-1).astype(f32)   # (1, 3D)
    wo_t = wo.T.astype(bf16)                                            # (D, D)
    w1_t = w1.T.astype(bf16)                                            # (D, 4D)
    w2_t = w2.T.astype(bf16)                                            # (4D, D)

    # Query-tile size: MXU-friendly multiples of 128/256 when S allows.
    if S % 256 == 0:
        tq = 256
    elif S % 128 == 0:
        tq = 128
    else:
        tq = S
    grid = (B, S // tq)

    def const_spec(a):
        n = a.ndim
        return pl.BlockSpec(a.shape, lambda b, q: (0,) * n)

    operands = [x,
                ln1_g.astype(f32), ln1_b.astype(f32),
                wqkv_t, bqkv,
                wo_t, bo.astype(f32),
                ln2_g.astype(f32), ln2_b.astype(f32),
                w1_t, b1.astype(f32),
                w2_t, b2.astype(f32)]

    in_specs = [pl.BlockSpec((1, S, D), lambda b, q: (b, 0, 0))]
    in_specs += [const_spec(a) for a in operands[1:]]

    return pl.pallas_call(
        functools.partial(gpt2_block_kernel, n_head=n_head, q_tile=tq),
        out_shape=jax.ShapeDtypeStruct((B, S, D), x.dtype),
        grid=grid,
        in_specs=in_specs,
        out_specs=pl.BlockSpec((1, tq, D), lambda b, q: (b, q, 0)),
        scratch_shapes=[pltpu.VMEM((S, 3 * D), bf16)],
        compiler_params=pltpu.CompilerParams(
            dimension_semantics=("parallel", "arbitrary"),
            vmem_limit_bytes=32 * 1024 * 1024),
    )(*operands)


# ---------------------------- pure-JAX reference ------------------------------

def reference_block(x, params, n_head):
    (ln1_g, ln1_b, wq, bq, wk, bk, wv, bv, wo, bo,
     ln2_g, ln2_b, w1, b1, w2, b2) = params
    B, S, D = x.shape
    hd = D // n_head

    def ln(z, g, b, eps=1e-5):
        mu = jnp.mean(z, axis=-1, keepdims=True)
        var = jnp.mean((z - mu) ** 2, axis=-1, keepdims=True)
        return (z - mu) / jnp.sqrt(var + eps) * g + b

    xn = ln(x, ln1_g, ln1_b)
    q = xn @ wq.T + bq
    k = xn @ wk.T + bk
    v = xn @ wv.T + bv
    q = q.reshape(B, S, n_head, hd).transpose(0, 2, 1, 3)
    k = k.reshape(B, S, n_head, hd).transpose(0, 2, 1, 3)
    v = v.reshape(B, S, n_head, hd).transpose(0, 2, 1, 3)
    e = jnp.einsum('bhqd,bhkd->bhqk', q, k) / math.sqrt(hd)
    p = jax.nn.softmax(e, axis=-1)
    ctx = jnp.einsum('bhqk,bhkd->bhqd', p, v)
    ctx = ctx.transpose(0, 2, 1, 3).reshape(B, S, D)
    attn_out = ctx @ wo.T + bo
    h1 = x + attn_out
    h1n = ln(h1, ln2_g, ln2_b)
    f = h1n @ w1.T + b1
    f = 0.5 * f * (1.0 + jax.lax.erf(f / math.sqrt(2.0)))
    f = f @ w2.T + b2
    return h1 + f


# ----------------------------------- main -------------------------------------

if __name__ == "__main__":
    B, S, D, H = 2, 8, 32, 4          # batch, seq, n_embd, n_head (small test)
    key = jax.random.PRNGKey(0)
    keys = jax.random.split(key, 12)

    def w(k, shape, scale=0.02):
        return (scale * jax.random.normal(k, shape)).astype(jnp.float32)

    # Parameters (deterministic init; PyTorch nn.Linear convention (out, in)).
    ln1_g = jnp.ones((1, D), jnp.float32)
    ln1_b = jnp.zeros((1, D), jnp.float32)
    wq, bq = w(keys[0], (D, D)), w(keys[1], (1, D))
    wk, bk = w(keys[2], (D, D)), w(keys[3], (1, D))
    wv, bv = w(keys[4], (D, D)), w(keys[5], (1, D))
    wo, bo = w(keys[6], (D, D)), w(keys[7], (1, D))
    ln2_g = jnp.ones((1, D), jnp.float32)
    ln2_b = jnp.zeros((1, D), jnp.float32)
    w1, b1 = w(keys[8], (4 * D, D)), w(keys[9], (1, 4 * D))
    w2, b2 = w(keys[10], (D, 4 * D)), w(keys[11], (1, D))

    params = [ln1_g, ln1_b, wq, bq, wk, bk, wv, bv, wo, bo,
              ln2_g, ln2_b, w1, b1, w2, b2]

    x = jax.random.normal(jax.random.PRNGKey(42), (B, S, D), jnp.float32)

    out = gpt2_natural_attention_block(x, params, n_head=H)
    out = jax.block_until_ready(out)

    ref = jax.block_until_ready(reference_block(x, params, H))
    assert out.shape == (B, S, D)
    assert jnp.allclose(out, ref, atol=2e-2, rtol=2e-2), (
        f"max abs err {jnp.max(jnp.abs(out - ref))}")

    # TODO(synk): the `present` KV-cache tuple / attention_probs outputs and the
    # `p._attention_energies` side-effect are stateful/debug-only and not
    # reproduced; only the hidden_states output path is implemented.
    print("KERNEL_OK")
</pallas_src>

<mosaic_0001>
module attributes {stable_mosaic.version = 11 : i64} {
  func.func @gpt2_block_kernel(%arg0: i32, %arg1: i32, %arg2: memref<1x8x32xf32, #tpu.memory_space<vmem>>, %arg3: memref<1x32xf32, #tpu.memory_space<vmem>>, %arg4: memref<1x32xf32, #tpu.memory_space<vmem>>, %arg5: memref<32x96xbf16, #tpu.memory_space<vmem>>, %arg6: memref<1x96xf32, #tpu.memory_space<vmem>>, %arg7: memref<32x32xbf16, #tpu.memory_space<vmem>>, %arg8: memref<1x32xf32, #tpu.memory_space<vmem>>, %arg9: memref<1x32xf32, #tpu.memory_space<vmem>>, %arg10: memref<1x32xf32, #tpu.memory_space<vmem>>, %arg11: memref<32x128xbf16, #tpu.memory_space<vmem>>, %arg12: memref<1x128xf32, #tpu.memory_space<vmem>>, %arg13: memref<128x32xbf16, #tpu.memory_space<vmem>>, %arg14: memref<1x32xf32, #tpu.memory_space<vmem>>, %arg15: memref<1x8x32xf32, #tpu.memory_space<vmem>>, %arg16: memref<8x96xbf16, #tpu.memory_space<vmem>>) attributes {dimension_semantics = [#tpu.dimension_semantics<parallel>, #tpu.dimension_semantics<arbitrary>], iteration_bounds = array<i64: 2, 1>, scalar_prefetch = 0 : i64, scratch_operands = 1 : i64, tpu.core_type = #tpu.core_type<tc>, window_params = [{transform_indices = @transform_0, window_bounds = array<i64: 1, 8, 32>}, {pipeline_mode = #tpu.pipeline_mode<synchronous>, transform_indices = @transform_1, window_bounds = array<i64: 1, 32>}, {pipeline_mode = #tpu.pipeline_mode<synchronous>, transform_indices = @transform_2, window_bounds = array<i64: 1, 32>}, {pipeline_mode = #tpu.pipeline_mode<synchronous>, transform_indices = @transform_3, window_bounds = array<i64: 32, 96>}, {pipeline_mode = #tpu.pipeline_mode<synchronous>, transform_indices = @transform_4, window_bounds = array<i64: 1, 96>}, {pipeline_mode = #tpu.pipeline_mode<synchronous>, transform_indices = @transform_5, window_bounds = array<i64: 32, 32>}, {pipeline_mode = #tpu.pipeline_mode<synchronous>, transform_indices = @transform_6, window_bounds = array<i64: 1, 32>}, {pipeline_mode = #tpu.pipeline_mode<synchronous>, transform_indices = @transform_7, window_bounds = array<i64: 1, 32>}, {pipeline_mode = #tpu.pipeline_mode<synchronous>, transform_indices = @transform_8, window_bounds = array<i64: 1, 32>}, {pipeline_mode = #tpu.pipeline_mode<synchronous>, transform_indices = @transform_9, window_bounds = array<i64: 32, 128>}, {pipeline_mode = #tpu.pipeline_mode<synchronous>, transform_indices = @transform_10, window_bounds = array<i64: 1, 128>}, {pipeline_mode = #tpu.pipeline_mode<synchronous>, transform_indices = @transform_11, window_bounds = array<i64: 128, 32>}, {pipeline_mode = #tpu.pipeline_mode<synchronous>, transform_indices = @transform_12, window_bounds = array<i64: 1, 32>}, {transform_indices = @transform_13, window_bounds = array<i64: 1, 8, 32>}]} {
    %c0_i32 = arith.constant 0 : i32
    %0 = arith.cmpi eq, %arg1, %c0_i32 : i32
    %1 = arith.extui %0 : i1 to i32
    %c0_i32_0 = arith.constant 0 : i32
    %2 = arith.cmpi ne, %1, %c0_i32_0 : i32
    scf.if %2 {
      %c0_63 = arith.constant 0 : index
      %c0_64 = arith.constant 0 : index
      %c0_65 = arith.constant 0 : index
      %143 = vector.load %arg2[%c0_63, %c0_64, %c0_65] : memref<1x8x32xf32, #tpu.memory_space<vmem>>, vector<1x8x32xf32>
      %144 = vector.shape_cast %143 : vector<1x8x32xf32> to vector<8x32xf32>
      %c0_66 = arith.constant 0 : index
      %c0_67 = arith.constant 0 : index
      %145 = vector.load %arg3[%c0_66, %c0_67] : memref<1x32xf32, #tpu.memory_space<vmem>>, vector<1x32xf32>
      %c0_68 = arith.constant 0 : index
      %c0_69 = arith.constant 0 : index
      %146 = vector.load %arg4[%c0_68, %c0_69] : memref<1x32xf32, #tpu.memory_space<vmem>>, vector<1x32xf32>
      %cst_70 = arith.constant dense<0.000000e+00> : vector<8xf32>
      %147 = vector.multi_reduction <add>, %144, %cst_70 [1] : vector<8x32xf32> to vector<8xf32>
      %148 = vector.shape_cast %147 : vector<8xf32> to vector<8x1xf32>
      %cst_71 = arith.constant 3.200000e+01 : f32
      %149 = vector.broadcast %cst_71 : f32 to vector<8x1xf32>
      %150 = arith.divf %148, %149 : vector<8x1xf32>
      %151 = vector.broadcast %150 : vector<8x1xf32> to vector<8x32xf32>
      %152 = arith.subf %144, %151 : vector<8x32xf32>
      %153 = arith.mulf %152, %152 : vector<8x32xf32>
      %cst_72 = arith.constant dense<0.000000e+00> : vector<8xf32>
      %154 = vector.multi_reduction <add>, %153, %cst_72 [1] : vector<8x32xf32> to vector<8xf32>
      %155 = vector.shape_cast %154 : vector<8xf32> to vector<8x1xf32>
      %cst_73 = arith.constant 3.200000e+01 : f32
      %156 = vector.broadcast %cst_73 : f32 to vector<8x1xf32>
      %157 = arith.divf %155, %156 : vector<8x1xf32>
      %158 = vector.broadcast %150 : vector<8x1xf32> to vector<8x32xf32>
      %159 = arith.subf %144, %158 : vector<8x32xf32>
      %cst_74 = arith.constant 9.99999974E-6 : f32
      %160 = vector.broadcast %cst_74 : f32 to vector<8x1xf32>
      %161 = arith.addf %157, %160 : vector<8x1xf32>
      %162 = math.rsqrt %161 : vector<8x1xf32>
      %163 = vector.broadcast %162 : vector<8x1xf32> to vector<8x32xf32>
      %164 = arith.mulf %159, %163 : vector<8x32xf32>
      %165 = vector.broadcast %145 : vector<1x32xf32> to vector<8x32xf32>
      %166 = arith.mulf %164, %165 : vector<8x32xf32>
      %167 = vector.broadcast %146 : vector<1x32xf32> to vector<8x32xf32>
      %168 = arith.addf %166, %167 : vector<8x32xf32>
      %169 = arith.truncf %168 : vector<8x32xf32> to vector<8x32xbf16>
      %c0_75 = arith.constant 0 : index
      %c0_76 = arith.constant 0 : index
      %170 = vector.load %arg5[%c0_75, %c0_76] : memref<32x96xbf16, #tpu.memory_space<vmem>>, vector<32x96xbf16>
      %cst_77 = arith.constant dense<0.000000e+00> : vector<8x96xf32>
      %171 = tpu.matmul %169, %170, %cst_77 {dimension_numbers = #tpu.dot_dimension_numbers<[1], [0], [0], [1], [0, 0, 1, 1], [], []>} : vector<8x32xbf16>, vector<32x96xbf16>, vector<8x96xf32> -> vector<8x96xf32>
      %c0_78 = arith.constant 0 : index
      %c0_79 = arith.constant 0 : index
      %172 = vector.load %arg6[%c0_78, %c0_79] : memref<1x96xf32, #tpu.memory_space<vmem>>, vector<1x96xf32>
      %173 = vector.broadcast %172 : vector<1x96xf32> to vector<8x96xf32>
      %174 = arith.addf %171, %173 : vector<8x96xf32>
      %175 = arith.truncf %174 : vector<8x96xf32> to vector<8x96xbf16>
      %c0_80 = arith.constant 0 : index
      %c0_81 = arith.constant 0 : index
      %176 = vector.load %arg16[%c0_80, %c0_81] : memref<8x96xbf16, #tpu.memory_space<vmem>>, vector<8x96xbf16>
      tpu.vector_store %arg16[%c0_80, %c0_81], %175 {strides = array<i32>} : memref<8x96xbf16, #tpu.memory_space<vmem>>, vector<8x96xbf16>,
    } else {
    }
    %c8_i32 = arith.constant 8 : i32
    %3 = arith.muli %arg1, %c8_i32 : i32
    %4 = tpu.assume_multiple %3, 8 : i32
    %c0 = arith.constant 0 : index
    %5 = arith.index_cast %4 : i32 to index
    %c0_1 = arith.constant 0 : index
    %6 = vector.load %arg2[%c0, %5, %c0_1] : memref<1x8x32xf32, #tpu.memory_space<vmem>>, vector<1x8x32xf32>
    %7 = vector.shape_cast %6 : vector<1x8x32xf32> to vector<8x32xf32>
    %8 = arith.index_cast %4 : i32 to index
    %c0_2 = arith.constant 0 : index
    %9 = vector.load %arg16[%8, %c0_2] : memref<8x96xbf16, #tpu.memory_space<vmem>>, vector<8x32xbf16>
    %cst = arith.constant 0.000000e+00 : f32
    %10 = vector.broadcast %cst : f32 to vector<8x32xf32>
    %11 = vector.extract_strided_slice %9 {offsets = [0, 0], sizes = [8, 8], strides = [1, 1]} : vector<8x32xbf16> to vector<8x8xbf16>
    %c0_3 = arith.constant 0 : index
    %c32 = arith.constant 32 : index
    %12 = vector.load %arg16[%c0_3, %c32] : memref<8x96xbf16, #tpu.memory_space<vmem>>, vector<8x8xbf16>
    %c0_4 = arith.constant 0 : index
    %c64 = arith.constant 64 : index
    %13 = vector.load %arg16[%c0_4, %c64] : memref<8x96xbf16, #tpu.memory_space<vmem>>, vector<8x8xbf16>
    %cst_5 = arith.constant dense<0.000000e+00> : vector<8x8xf32>
    %14 = tpu.matmul %11, %12, %cst_5 {dimension_numbers = #tpu.dot_dimension_numbers<[1], [1], [0], [0], [0, 0, 1, 0], [], []>} : vector<8x8xbf16>, vector<8x8xbf16>, vector<8x8xf32> -> vector<8x8xf32>
    %cst_6 = arith.constant dense<0xFF800000> : vector<8xf32>
    %15 = vector.multi_reduction <maximumf>, %14, %cst_6 [1] : vector<8x8xf32> to vector<8xf32>
    %16 = vector.shape_cast %15 : vector<8xf32> to vector<8x1xf32>
    %17 = vector.broadcast %16 : vector<8x1xf32> to vector<8x8xf32>
    %18 = arith.subf %14, %17 : vector<8x8xf32>
    %19 = math.exp %18 : vector<8x8xf32>
    %cst_7 = arith.constant dense<0.000000e+00> : vector<8xf32>
    %20 = vector.multi_reduction <add>, %19, %cst_7 [1] : vector<8x8xf32> to vector<8xf32>
    %21 = vector.shape_cast %20 : vector<8xf32> to vector<8x1xf32>
    %22 = arith.truncf %19 : vector<8x8xf32> to vector<8x8xbf16>
    %cst_8 = arith.constant dense<0.000000e+00> : vector<8x8xf32>
    %23 = tpu.matmul %22, %13, %cst_8 {dimension_numbers = #tpu.dot_dimension_numbers<[1], [0], [0], [1], [0, 0, 1, 1], [], []>} : vector<8x8xbf16>, vector<8x8xbf16>, vector<8x8xf32> -> vector<8x8xf32>
    %24 = tpu.reciprocal %21 {approx = true} : vector<8x1xf32> -> vector<8x1xf32>
    %25 = vector.broadcast %24 : vector<8x1xf32> to vector<8x8xf32>
    %26 = arith.mulf %23, %25 : vector<8x8xf32>
    %27 = arith.truncf %26 : vector<8x8xf32> to vector<8x8xbf16>
    %c0_9 = arith.constant 0 : index
    %c0_10 = arith.constant 0 : index
    %28 = vector.load %arg7[%c0_9, %c0_10] : memref<32x32xbf16, #tpu.memory_space<vmem>>, vector<8x32xbf16>
    %cst_11 = arith.constant dense<0.000000e+00> : vector<8x32xf32>
    %29 = tpu.matmul %27, %28, %cst_11 {dimension_numbers = #tpu.dot_dimension_numbers<[1], [0], [0], [1], [0, 0, 1, 1], [], []>} : vector<8x8xbf16>, vector<8x32xbf16>, vector<8x32xf32> -> vector<8x32xf32>
    %30 = arith.addf %10, %29 : vector<8x32xf32>
    %31 = vector.extract_strided_slice %9 {offsets = [0, 8], sizes = [8, 8], strides = [1, 1]} : vector<8x32xbf16> to vector<8x8xbf16>
    %c0_12 = arith.constant 0 : index
    %c40 = arith.constant 40 : index
    %32 = vector.load %arg16[%c0_12, %c40] : memref<8x96xbf16, #tpu.memory_space<vmem>>, vector<8x8xbf16>
    %c0_13 = arith.constant 0 : index
    %c72 = arith.constant 72 : index
    %33 = vector.load %arg16[%c0_13, %c72] : memref<8x96xbf16, #tpu.memory_space<vmem>>, vector<8x8xbf16>
    %cst_14 = arith.constant dense<0.000000e+00> : vector<8x8xf32>
    %34 = tpu.matmul %31, %32, %cst_14 {dimension_numbers = #tpu.dot_dimension_numbers<[1], [1], [0], [0], [0, 0, 1, 0], [], []>} : vector<8x8xbf16>, vector<8x8xbf16>, vector<8x8xf32> -> vector<8x8xf32>
    %cst_15 = arith.constant dense<0xFF800000> : vector<8xf32>
    %35 = vector.multi_reduction <maximumf>, %34, %cst_15 [1] : vector<8x8xf32> to vector<8xf32>
    %36 = vector.shape_cast %35 : vector<8xf32> to vector<8x1xf32>
    %37 = vector.broadcast %36 : vector<8x1xf32> to vector<8x8xf32>
    %38 = arith.subf %34, %37 : vector<8x8xf32>
    %39 = math.exp %38 : vector<8x8xf32>
    %cst_16 = arith.constant dense<0.000000e+00> : vector<8xf32>
    %40 = vector.multi_reduction <add>, %39, %cst_16 [1] : vector<8x8xf32> to vector<8xf32>
    %41 = vector.shape_cast %40 : vector<8xf32> to vector<8x1xf32>
    %42 = arith.truncf %39 : vector<8x8xf32> to vector<8x8xbf16>
    %cst_17 = arith.constant dense<0.000000e+00> : vector<8x8xf32>
    %43 = tpu.matmul %42, %33, %cst_17 {dimension_numbers = #tpu.dot_dimension_numbers<[1], [0], [0], [1], [0, 0, 1, 1], [], []>} : vector<8x8xbf16>, vector<8x8xbf16>, vector<8x8xf32> -> vector<8x8xf32>
    %44 = tpu.reciprocal %41 {approx = true} : vector<8x1xf32> -> vector<8x1xf32>
    %45 = vector.broadcast %44 : vector<8x1xf32> to vector<8x8xf32>
    %46 = arith.mulf %43, %45 : vector<8x8xf32>
    %47 = arith.truncf %46 : vector<8x8xf32> to vector<8x8xbf16>
    %c8 = arith.constant 8 : index
    %c0_18 = arith.constant 0 : index
    %48 = vector.load %arg7[%c8, %c0_18] : memref<32x32xbf16, #tpu.memory_space<vmem>>, vector<8x32xbf16>
    %cst_19 = arith.constant dense<0.000000e+00> : vector<8x32xf32>
    %49 = tpu.matmul %47, %48, %cst_19 {dimension_numbers = #tpu.dot_dimension_numbers<[1], [0], [0], [1], [0, 0, 1, 1], [], []>} : vector<8x8xbf16>, vector<8x32xbf16>, vector<8x32xf32> -> vector<8x32xf32>
    %50 = arith.addf %30, %49 : vector<8x32xf32>
    %51 = vector.extract_strided_slice %9 {offsets = [0, 16], sizes = [8, 8], strides = [1, 1]} : vector<8x32xbf16> to vector<8x8xbf16>
    %c0_20 = arith.constant 0 : index
    %c48 = arith.constant 48 : index
    %52 = vector.load %arg16[%c0_20, %c48] : memref<8x96xbf16, #tpu.memory_space<vmem>>, vector<8x8xbf16>
    %c0_21 = arith.constant 0 : index
    %c80 = arith.constant 80 : index
    %53 = vector.load %arg16[%c0_21, %c80] : memref<8x96xbf16, #tpu.memory_space<vmem>>, vector<8x8xbf16>
    %cst_22 = arith.constant dense<0.000000e+00> : vector<8x8xf32>
    %54 = tpu.matmul %51, %52, %cst_22 {dimension_numbers = #tpu.dot_dimension_numbers<[1], [1], [0], [0], [0, 0, 1, 0], [], []>} : vector<8x8xbf16>, vector<8x8xbf16>, vector<8x8xf32> -> vector<8x8xf32>
    %cst_23 = arith.constant dense<0xFF800000> : vector<8xf32>
    %55 = vector.multi_reduction <maximumf>, %54, %cst_23 [1] : vector<8x8xf32> to vector<8xf32>
    %56 = vector.shape_cast %55 : vector<8xf32> to vector<8x1xf32>
    %57 = vector.broadcast %56 : vector<8x1xf32> to vector<8x8xf32>
    %58 = arith.subf %54, %57 : vector<8x8xf32>
    %59 = math.exp %58 : vector<8x8xf32>
    %cst_24 = arith.constant dense<0.000000e+00> : vector<8xf32>
    %60 = vector.multi_reduction <add>, %59, %cst_24 [1] : vector<8x8xf32> to vector<8xf32>
    %61 = vector.shape_cast %60 : vector<8xf32> to vector<8x1xf32>
    %62 = arith.truncf %59 : vector<8x8xf32> to vector<8x8xbf16>
    %cst_25 = arith.constant dense<0.000000e+00> : vector<8x8xf32>
    %63 = tpu.matmul %62, %53, %cst_25 {dimension_numbers = #tpu.dot_dimension_numbers<[1], [0], [0], [1], [0, 0, 1, 1], [], []>} : vector<8x8xbf16>, vector<8x8xbf16>, vector<8x8xf32> -> vector<8x8xf32>
    %64 = tpu.reciprocal %61 {approx = true} : vector<8x1xf32> -> vector<8x1xf32>
    %65 = vector.broadcast %64 : vector<8x1xf32> to vector<8x8xf32>
    %66 = arith.mulf %63, %65 : vector<8x8xf32>
    %67 = arith.truncf %66 : vector<8x8xf32> to vector<8x8xbf16>
    %c16 = arith.constant 16 : index
    %c0_26 = arith.constant 0 : index
    %68 = vector.load %arg7[%c16, %c0_26] : memref<32x32xbf16, #tpu.memory_space<vmem>>, vector<8x32xbf16>
    %cst_27 = arith.constant dense<0.000000e+00> : vector<8x32xf32>
    %69 = tpu.matmul %67, %68, %cst_27 {dimension_numbers = #tpu.dot_dimension_numbers<[1], [0], [0], [1], [0, 0, 1, 1], [], []>} : vector<8x8xbf16>, vector<8x32xbf16>, vector<8x32xf32> -> vector<8x32xf32>
    %70 = arith.addf %50, %69 : vector<8x32xf32>
    %71 = vector.extract_strided_slice %9 {offsets = [0, 24], sizes = [8, 8], strides = [1, 1]} : vector<8x32xbf16> to vector<8x8xbf16>
    %c0_28 = arith.constant 0 : index
    %c56 = arith.constant 56 : index
    %72 = vector.load %arg16[%c0_28, %c56] : memref<8x96xbf16, #tpu.memory_space<vmem>>, vector<8x8xbf16>
    %c0_29 = arith.constant 0 : index
    %c88 = arith.constant 88 : index
    %73 = vector.load %arg16[%c0_29, %c88] : memref<8x96xbf16, #tpu.memory_space<vmem>>, vector<8x8xbf16>
    %cst_30 = arith.constant dense<0.000000e+00> : vector<8x8xf32>
    %74 = tpu.matmul %71, %72, %cst_30 {dimension_numbers = #tpu.dot_dimension_numbers<[1], [1], [0], [0], [0, 0, 1, 0], [], []>} : vector<8x8xbf16>, vector<8x8xbf16>, vector<8x8xf32> -> vector<8x8xf32>
    %cst_31 = arith.constant dense<0xFF800000> : vector<8xf32>
    %75 = vector.multi_reduction <maximumf>, %74, %cst_31 [1] : vector<8x8xf32> to vector<8xf32>
    %76 = vector.shape_cast %75 : vector<8xf32> to vector<8x1xf32>
    %77 = vector.broadcast %76 : vector<8x1xf32> to vector<8x8xf32>
    %78 = arith.subf %74, %77 : vector<8x8xf32>
    %79 = math.exp %78 : vector<8x8xf32>
    %cst_32 = arith.constant dense<0.000000e+00> : vector<8xf32>
    %80 = vector.multi_reduction <add>, %79, %cst_32 [1] : vector<8x8xf32> to vector<8xf32>
    %81 = vector.shape_cast %80 : vector<8xf32> to vector<8x1xf32>
    %82 = arith.truncf %79 : vector<8x8xf32> to vector<8x8xbf16>
    %cst_33 = arith.constant dense<0.000000e+00> : vector<8x8xf32>
    %83 = tpu.matmul %82, %73, %cst_33 {dimension_numbers = #tpu.dot_dimension_numbers<[1], [0], [0], [1], [0, 0, 1, 1], [], []>} : vector<8x8xbf16>, vector<8x8xbf16>, vector<8x8xf32> -> vector<8x8xf32>
    %84 = tpu.reciprocal %81 {approx = true} : vector<8x1xf32> -> vector<8x1xf32>
    %85 = vector.broadcast %84 : vector<8x1xf32> to vector<8x8xf32>
    %86 = arith.mulf %83, %85 : vector<8x8xf32>
    %87 = arith.truncf %86 : vector<8x8xf32> to vector<8x8xbf16>
    %c24 = arith.constant 24 : index
    %c0_34 = arith.constant 0 : index
    %88 = vector.load %arg7[%c24, %c0_34] : memref<32x32xbf16, #tpu.memory_space<vmem>>, vector<8x32xbf16>
    %cst_35 = arith.constant dense<0.000000e+00> : vector<8x32xf32>
    %89 = tpu.matmul %87, %88, %cst_35 {dimension_numbers = #tpu.dot_dimension_numbers<[1], [0], [0], [1], [0, 0, 1, 1], [], []>} : vector<8x8xbf16>, vector<8x32xbf16>, vector<8x32xf32> -> vector<8x32xf32>
    %90 = arith.addf %70, %89 : vector<8x32xf32>
    %c0_36 = arith.constant 0 : index
    %c0_37 = arith.constant 0 : index
    %91 = vector.load %arg8[%c0_36, %c0_37] : memref<1x32xf32, #tpu.memory_space<vmem>>, vector<1x32xf32>
    %92 = vector.broadcast %91 : vector<1x32xf32> to vector<8x32xf32>
    %93 = arith.addf %90, %92 : vector<8x32xf32>
    %94 = arith.addf %7, %93 : vector<8x32xf32>
    %c0_38 = arith.constant 0 : index
    %c0_39 = arith.constant 0 : index
    %95 = vector.load %arg9[%c0_38, %c0_39] : memref<1x32xf32, #tpu.memory_space<vmem>>, vector<1x32xf32>
    %c0_40 = arith.constant 0 : index
    %c0_41 = arith.constant 0 : index
    %96 = vector.load %arg10[%c0_40, %c0_41] : memref<1x32xf32, #tpu.memory_space<vmem>>, vector<1x32xf32>
    %cst_42 = arith.constant dense<0.000000e+00> : vector<8xf32>
    %97 = vector.multi_reduction <add>, %94, %cst_42 [1] : vector<8x32xf32> to vector<8xf32>
    %98 = vector.shape_cast %97 : vector<8xf32> to vector<8x1xf32>
    %cst_43 = arith.constant 3.200000e+01 : f32
    %99 = vector.broadcast %cst_43 : f32 to vector<8x1xf32>
    %100 = arith.divf %98, %99 : vector<8x1xf32>
    %101 = vector.broadcast %100 : vector<8x1xf32> to vector<8x32xf32>
    %102 = arith.subf %94, %101 : vector<8x32xf32>
    %103 = arith.mulf %102, %102 : vector<8x32xf32>
    %cst_44 = arith.constant dense<0.000000e+00> : vector<8xf32>
    %104 = vector.multi_reduction <add>, %103, %cst_44 [1] : vector<8x32xf32> to vector<8xf32>
    %105 = vector.shape_cast %104 : vector<8xf32> to vector<8x1xf32>
    %cst_45 = arith.constant 3.200000e+01 : f32
    %106 = vector.broadcast %cst_45 : f32 to vector<8x1xf32>
    %107 = arith.divf %105, %106 : vector<8x1xf32>
    %108 = vector.broadcast %100 : vector<8x1xf32> to vector<8x32xf32>
    %109 = arith.subf %94, %108 : vector<8x32xf32>
    %cst_46 = arith.constant 9.99999974E-6 : f32
    %110 = vector.broadcast %cst_46 : f32 to vector<8x1xf32>
    %111 = arith.addf %107, %110 : vector<8x1xf32>
    %112 = math.rsqrt %111 : vector<8x1xf32>
    %113 = vector.broadcast %112 : vector<8x1xf32> to vector<8x32xf32>
    %114 = arith.mulf %109, %113 : vector<8x32xf32>
    %115 = vector.broadcast %95 : vector<1x32xf32> to vector<8x32xf32>
    %116 = arith.mulf %114, %115 : vector<8x32xf32>
    %117 = vector.broadcast %96 : vector<1x32xf32> to vector<8x32xf32>
    %118 = arith.addf %116, %117 : vector<8x32xf32>
    %119 = arith.truncf %118 : vector<8x32xf32> to vector<8x32xbf16>
    %c0_47 = arith.constant 0 : index
    %c0_48 = arith.constant 0 : index
    %120 = vector.load %arg11[%c0_47, %c0_48] : memref<32x128xbf16, #tpu.memory_space<vmem>>, vector<32x128xbf16>
    %cst_49 = arith.constant dense<0.000000e+00> : vector<8x128xf32>
    %121 = tpu.matmul %119, %120, %cst_49 {dimension_numbers = #tpu.dot_dimension_numbers<[1], [0], [0], [1], [0, 0, 1, 1], [], []>} : vector<8x32xbf16>, vector<32x128xbf16>, vector<8x128xf32> -> vector<8x128xf32>
    %c0_50 = arith.constant 0 : index
    %c0_51 = arith.constant 0 : index
    %122 = vector.load %arg12[%c0_50, %c0_51] : memref<1x128xf32, #tpu.memory_space<vmem>>, vector<1x128xf32>
    %123 = vector.broadcast %122 : vector<1x128xf32> to vector<8x128xf32>
    %124 = arith.addf %121, %123 : vector<8x128xf32>
    %cst_52 = arith.constant 5.000000e-01 : f32
    %125 = vector.broadcast %cst_52 : f32 to vector<8x128xf32>
    %126 = arith.mulf %125, %124 : vector<8x128xf32>
    %cst_53 = arith.constant 0.707106769 : f32
    %127 = vector.broadcast %cst_53 : f32 to vector<8x128xf32>
    %128 = arith.mulf %124, %127 : vector<8x128xf32>
    %129 = math.erf %128 : vector<8x128xf32>
    %cst_54 = arith.constant 1.000000e+00 : f32
    %130 = vector.broadcast %cst_54 : f32 to vector<8x128xf32>
    %131 = arith.addf %130, %129 : vector<8x128xf32>
    %132 = arith.mulf %126, %131 : vector<8x128xf32>
    %133 = arith.truncf %132 : vector<8x128xf32> to vector<8x128xbf16>
    %c0_55 = arith.constant 0 : index
    %c0_56 = arith.constant 0 : index
    %134 = vector.load %arg13[%c0_55, %c0_56] : memref<128x32xbf16, #tpu.memory_space<vmem>>, vector<128x32xbf16>
    %cst_57 = arith.constant dense<0.000000e+00> : vector<8x32xf32>
    %135 = tpu.matmul %133, %134, %cst_57 {dimension_numbers = #tpu.dot_dimension_numbers<[1], [0], [0], [1], [0, 0, 1, 1], [], []>} : vector<8x128xbf16>, vector<128x32xbf16>, vector<8x32xf32> -> vector<8x32xf32>
    %c0_58 = arith.constant 0 : index
    %c0_59 = arith.constant 0 : index
    %136 = vector.load %arg14[%c0_58, %c0_59] : memref<1x32xf32, #tpu.memory_space<vmem>>, vector<1x32xf32>
    %137 = vector.broadcast %136 : vector<1x32xf32> to vector<8x32xf32>
    %138 = arith.addf %135, %137 : vector<8x32xf32>
    %139 = arith.addf %94, %138 : vector<8x32xf32>
    %c0_60 = arith.constant 0 : index
    %c0_61 = arith.constant 0 : index
    %c0_62 = arith.constant 0 : index
    %140 = vector.load %arg15[%c0_60, %c0_61, %c0_62] : memref<1x8x32xf32, #tpu.memory_space<vmem>>, vector<1x8x32xf32>
    %141 = vector.shape_cast %140 : vector<1x8x32xf32> to vector<8x32xf32>
    %142 = vector.shape_cast %139 : vector<8x32xf32> to vector<1x8x32xf32>
    tpu.vector_store %arg15[%c0_60, %c0_61, %c0_62], %142 {strides = array<i32>} : memref<1x8x32xf32, #tpu.memory_space<vmem>>, vector<1x8x32xf32>,
    return
  }
  func.func @transform_0(%arg0: i32, %arg1: i32) -> (i32, i32, i32) {
    %c0_i32 = arith.constant 0 : i32
    %c0_i32_0 = arith.constant 0 : i32
    %c0_i32_1 = arith.constant 0 : i32
    return %arg0, %c0_i32, %c0_i32_0 : i32, i32, i32
  }
  func.func @transform_1(%arg0: i32, %arg1: i32) -> (i32, i32) {
    %c0_i32 = arith.constant 0 : i32
    %c0_i32_0 = arith.constant 0 : i32
    %c0_i32_1 = arith.constant 0 : i32
    return %c0_i32, %c0_i32_0 : i32, i32
  }
  func.func @transform_2(%arg0: i32, %arg1: i32) -> (i32, i32) {
    %c0_i32 = arith.constant 0 : i32
    %c0_i32_0 = arith.constant 0 : i32
    %c0_i32_1 = arith.constant 0 : i32
    return %c0_i32, %c0_i32_0 : i32, i32
  }
  func.func @transform_3(%arg0: i32, %arg1: i32) -> (i32, i32) {
    %c0_i32 = arith.constant 0 : i32
    %c0_i32_0 = arith.constant 0 : i32
    %c0_i32_1 = arith.constant 0 : i32
    return %c0_i32, %c0_i32_0 : i32, i32
  }
  func.func @transform_4(%arg0: i32, %arg1: i32) -> (i32, i32) {
    %c0_i32 = arith.constant 0 : i32
    %c0_i32_0 = arith.constant 0 : i32
    %c0_i32_1 = arith.constant 0 : i32
    return %c0_i32, %c0_i32_0 : i32, i32
  }
  func.func @transform_5(%arg0: i32, %arg1: i32) -> (i32, i32) {
    %c0_i32 = arith.constant 0 : i32
    %c0_i32_0 = arith.constant 0 : i32
    %c0_i32_1 = arith.constant 0 : i32
    return %c0_i32, %c0_i32_0 : i32, i32
  }
  func.func @transform_6(%arg0: i32, %arg1: i32) -> (i32, i32) {
    %c0_i32 = arith.constant 0 : i32
    %c0_i32_0 = arith.constant 0 : i32
    %c0_i32_1 = arith.constant 0 : i32
    return %c0_i32, %c0_i32_0 : i32, i32
  }
  func.func @transform_7(%arg0: i32, %arg1: i32) -> (i32, i32) {
    %c0_i32 = arith.constant 0 : i32
    %c0_i32_0 = arith.constant 0 : i32
    %c0_i32_1 = arith.constant 0 : i32
    return %c0_i32, %c0_i32_0 : i32, i32
  }
  func.func @transform_8(%arg0: i32, %arg1: i32) -> (i32, i32) {
    %c0_i32 = arith.constant 0 : i32
    %c0_i32_0 = arith.constant 0 : i32
    %c0_i32_1 = arith.constant 0 : i32
    return %c0_i32, %c0_i32_0 : i32, i32
  }
  func.func @transform_9(%arg0: i32, %arg1: i32) -> (i32, i32) {
    %c0_i32 = arith.constant 0 : i32
    %c0_i32_0 = arith.constant 0 : i32
    %c0_i32_1 = arith.constant 0 : i32
    return %c0_i32, %c0_i32_0 : i32, i32
  }
  func.func @transform_10(%arg0: i32, %arg1: i32) -> (i32, i32) {
    %c0_i32 = arith.constant 0 : i32
    %c0_i32_0 = arith.constant 0 : i32
    %c0_i32_1 = arith.constant 0 : i32
    return %c0_i32, %c0_i32_0 : i32, i32
  }
  func.func @transform_11(%arg0: i32, %arg1: i32) -> (i32, i32) {
    %c0_i32 = arith.constant 0 : i32
    %c0_i32_0 = arith.constant 0 : i32
    %c0_i32_1 = arith.constant 0 : i32
    return %c0_i32, %c0_i32_0 : i32, i32
  }
  func.func @transform_12(%arg0: i32, %arg1: i32) -> (i32, i32) {
    %c0_i32 = arith.constant 0 : i32
    %c0_i32_0 = arith.constant 0 : i32
    %c0_i32_1 = arith.constant 0 : i32
    return %c0_i32, %c0_i32_0 : i32, i32
  }
  func.func @transform_13(%arg0: i32, %arg1: i32) -> (i32, i32, i32) {
    %c0_i32 = arith.constant 0 : i32
    %c0_i32_0 = arith.constant 0 : i32
    return %arg0, %arg1, %c0_i32 : i32, i32, i32
  }
}

</mosaic_0001>

<llo_original>
// kernel: tpu_custom_call.1
$region0: #{tpu_custom_call.1}
  #allocation0 [shape = 'u32[]', space=smem, size = 0x4, offset = 0x4, fixed_abs, tag = 'smem constant byte address 0x4 - core index']
  #allocation1 [shape = 'u32[144,128]{1,0:T(1,128)}', space=vmem, size = 0x12000, scoped, tag = 'internal scratch']
  #allocation2 [shape = 'bf16[8,96]{1,0:T(8,128)(2,1)}', space=vmem, size = 0x800, scoped, tag = 'scratch operand']
  %s0 = inlined_call_operand.vmem [shape: f32[2,8,32], index: 0, kind: input, shape index: {}]
  %s1 = inlined_call_operand.vmem [shape: f32[1,32], index: 1, kind: input, shape index: {}]
  %s2 = inlined_call_operand.vmem [shape: f32[1,32], index: 2, kind: input, shape index: {}]
  %s3 = inlined_call_operand.vmem [shape: bf16[32,96], index: 3, kind: input, shape index: {}]
  %s4 = inlined_call_operand.vmem [shape: f32[1,96], index: 4, kind: input, shape index: {}]
  %s5 = inlined_call_operand.vmem [shape: bf16[32,32], index: 5, kind: input, shape index: {}]
  %s6 = inlined_call_operand.vmem [shape: f32[1,32], index: 6, kind: input, shape index: {}]
  %s7 = inlined_call_operand.vmem [shape: f32[1,32], index: 7, kind: input, shape index: {}]
  %s8 = inlined_call_operand.vmem [shape: f32[1,32], index: 8, kind: input, shape index: {}]
  %s9 = inlined_call_operand.vmem [shape: bf16[32,128], index: 9, kind: input, shape index: {}]
  %s10 = inlined_call_operand.vmem [shape: f32[1,128], index: 10, kind: input, shape index: {}]
  %s11 = inlined_call_operand.vmem [shape: bf16[128,32], index: 11, kind: input, shape index: {}]
  %s12 = inlined_call_operand.vmem [shape: f32[1,32], index: 12, kind: input, shape index: {}]
  %s13 = inlined_call_operand.hbm [shape: f32[2,8,32], index: 13, kind: output, shape index: {}]
  %s14 = sld [smem:[#allocation0]]
  $region89: #{tpu_custom_call.1} parent=0
    _
  %s16 = ssub.s32 1, %s14
  %s17 = scalar_select 0, %s16, %s14
  $region1: #{tpu_custom_call.1} parent=0
    #allocation3 [shape = 'u8[8192]{0}', space=vmem, size = 0x2000, scoped, tag = 'output window, operand 0']
    #allocation4 [shape = 's32[2]{0}', space=sflag, size = 0x8, scoped, tag = 'scoped memory for tpu_custom_call.1']
    %18 = vsyncpa [#allocation4], 0
    %s19 = scalar_lea.sflag [#allocation4], 1
    %20 = vsyncpa %s19, 0
    loop: start=0, step=1, limit=4
    $region2: #{tpu_custom_call.1} parent=1 // loop_pre_header
      _
    $region3: #{tpu_custom_call.1} parent=1 // loop_header
      %s22 = sphi 0, %s26
      %p23 = scmp.ge.s32.totalorder %s22, 4
      %s29 = sphi 0, %s41
      %s30 = sphi 0, %s37
      %s31 = sphi 0, %s29
      %s32 = sphi 0, %s30
      %s33 = sphi 0, %s31
      %s34 = sphi 0, %s32
      %s44 = sphi 0, %s46
      %s47 = sphi 0, %s44
      %s48 = sphi 0, %s47
      %s64 = sphi 0, %s48
      %s68 = sphi 0, %s68
      %s70 = sphi 0, %s68
      %s71 = sphi 0, %s70
      %s85 = sphi 0, %s71
      %s89 = sphi 0, %s89
      %s91 = sphi 0, %s89
      %s92 = sphi 0, %s91
      %s106 = sphi 0, %s92
      %s110 = sphi 0, %s110
      %s112 = sphi 0, %s110
      %s113 = sphi 0, %s112
      %s127 = sphi 0, %s113
      %s131 = sphi 0, %s131
      %s133 = sphi 0, %s131
      %s134 = sphi 0, %s133
      %s148 = sphi 0, %s134
      %s152 = sphi 0, %s152
      %s154 = sphi 0, %s152
      %s155 = sphi 0, %s154
      %s169 = sphi 0, %s155
      %s173 = sphi 0, %s173
      %s175 = sphi 0, %s173
      %s176 = sphi 0, %s175
      %s190 = sphi 0, %s176
      %s194 = sphi 0, %s194
      %s196 = sphi 0, %s194
      %s197 = sphi 0, %s196
      %s211 = sphi 0, %s197
      %s215 = sphi 0, %s215
      %s217 = sphi 0, %s215
      %s218 = sphi 0, %s217
      %s232 = sphi 0, %s218
      %s236 = sphi 0, %s236
      %s238 = sphi 0, %s236
      %s239 = sphi 0, %s238
      %s253 = sphi 0, %s239
      %s257 = sphi 0, %s257
      %s259 = sphi 0, %s257
      %s260 = sphi 0, %s259
      %s274 = sphi 0, %s260
      %s278 = sphi 0, %s278
      %s280 = sphi 0, %s278
      %s281 = sphi 0, %s280
      %s295 = sphi 0, %s281
      %s299 = sphi 0, %s299
      %s301 = sphi 0, %s299
      %s302 = sphi 0, %s301
      %s316 = sphi 0, %s302
      %s324 = sphi 0, %s326
      %s327 = sphi 0, %s324
      %s328 = sphi 0, %s327
      %s344 = sphi 0, %s328
    $region4: #{tpu_custom_call.1} parent=1 // loop_header_branch
      %25 = sbr.rel (%p23) target = $region8
    $region5: #{tpu_custom_call.1} parent=1 // loop_body
      %s27 = ssub.s32 %s22, 1
      %s28 = ssub.s32 %s22, 2
      %s35 = sadd.s32 1, %s30
      %p36 = scmp.ge.s32.totalorder %s35, 1
      %s37 = scalar_select %p36, 0, %s35
      %s38 = sadd.s32 1, %s29
      %s39 = scalar_select %p36, %s38, %s29
      %p40 = scmp.ge.s32.totalorder %s39, 2
      %s41 = scalar_select %p40, 0, %s39
      %s42 = ssub.s32 %s29, %s41
      %p43 = scmp.eq.s32.totalorder %s42, 0
      %s45 = sadd.s32 %s44, 1
      %s46 = scalar_select %p43, %s44, %s45
      %p49 = pneg %p43
      %p50 = scmp.eq.s32.totalorder %s22, 1
      %p51 = por %p49, %p50
      %p52 = scmp.ne.s32.totalorder %s44, %s47
      %p53 = scmp.eq.s32.totalorder %s22, 0
      %p54 = por %p52, %p53
      %p55 = scmp.ne.s32.totalorder %s44, %s47
      %p56 = scmp.eq.s32.totalorder %s27, 1
      %p57 = por %p55, %p56
      %p58 = scmp.ne.s32.totalorder %s47, %s48
      %p59 = scmp.eq.s32.totalorder %s27, 0
      %p60 = por %p58, %p59
      %p61 = scmp.ne.s32.totalorder %s47, %s48
      %p62 = scmp.eq.s32.totalorder %s28, 1
      %p63 = por %p61, %p62
      %p65 = scmp.ne.s32.totalorder %s48, %s64
      %p66 = scmp.eq.s32.totalorder %s28, 0
      %p67 = por %p65, %p66
      %s69 = sadd.s32 %s68, 1
      %p72 = scmp.eq.s32.totalorder %s22, 1
      %p73 = scmp.ne.s32.totalorder %s68, %s70
      %p74 = scmp.eq.s32.totalorder %s22, 0
      %p75 = por %p73, %p74
      %p76 = scmp.ne.s32.totalorder %s68, %s70
      %p77 = scmp.eq.s32.totalorder %s27, 1
      %p78 = por %p76, %p77
      %p79 = scmp.ne.s32.totalorder %s70, %s71
      %p80 = scmp.eq.s32.totalorder %s27, 0
      %p81 = por %p79, %p80
      %p82 = scmp.ne.s32.totalorder %s70, %s71
      %p83 = scmp.eq.s32.totalorder %s28, 1
      %p84 = por %p82, %p83
      %p86 = scmp.ne.s32.totalorder %s71, %s85
      %p87 = scmp.eq.s32.totalorder %s28, 0
      %p88 = por %p86, %p87
      %s90 = sadd.s32 %s89, 1
      %p93 = scmp.eq.s32.totalorder %s22, 1
      %p94 = scmp.ne.s32.totalorder %s89, %s91
      %p95 = scmp.eq.s32.totalorder %s22, 0
      %p96 = por %p94, %p95
      %p97 = scmp.ne.s32.totalorder %s89, %s91
      %p98 = scmp.eq.s32.totalorder %s27, 1
      %p99 = por %p97, %p98
      %p100 = scmp.ne.s32.totalorder %s91, %s92
      %p101 = scmp.eq.s32.totalorder %s27, 0
      %p102 = por %p100, %p101
      %p103 = scmp.ne.s32.totalorder %s91, %s92
      %p104 = scmp.eq.s32.totalorder %s28, 1
      %p105 = por %p103, %p104
      %p107 = scmp.ne.s32.totalorder %s92, %s106
      %p108 = scmp.eq.s32.totalorder %s28, 0
      %p109 = por %p107, %p108
      %s111 = sadd.s32 %s110, 1
      %p114 = scmp.eq.s32.totalorder %s22, 1
      %p115 = scmp.ne.s32.totalorder %s110, %s112
      %p116 = scmp.eq.s32.totalorder %s22, 0
      %p117 = por %p115, %p116
      %p118 = scmp.ne.s32.totalorder %s110, %s112
      %p119 = scmp.eq.s32.totalorder %s27, 1
      %p120 = por %p118, %p119
      %p121 = scmp.ne.s32.totalorder %s112, %s113
      %p122 = scmp.eq.s32.totalorder %s27, 0
      %p123 = por %p121, %p122
      %p124 = scmp.ne.s32.totalorder %s112, %s113
      %p125 = scmp.eq.s32.totalorder %s28, 1
      %p126 = por %p124, %p125
      %p128 = scmp.ne.s32.totalorder %s113, %s127
      %p129 = scmp.eq.s32.totalorder %s28, 0
      %p130 = por %p128, %p129
      %s132 = sadd.s32 %s131, 1
      %p135 = scmp.eq.s32.totalorder %s22, 1
      %p136 = scmp.ne.s32.totalorder %s131, %s133
      %p137 = scmp.eq.s32.totalorder %s22, 0
      %p138 = por %p136, %p137
      %p139 = scmp.ne.s32.totalorder %s131, %s133
      %p140 = scmp.eq.s32.totalorder %s27, 1
      %p141 = por %p139, %p140
      %p142 = scmp.ne.s32.totalorder %s133, %s134
      %p143 = scmp.eq.s32.totalorder %s27, 0
      %p144 = por %p142, %p143
      %p145 = scmp.ne.s32.totalorder %s133, %s134
      %p146 = scmp.eq.s32.totalorder %s28, 1
      %p147 = por %p145, %p146
      %p149 = scmp.ne.s32.totalorder %s134, %s148
      %p150 = scmp.eq.s32.totalorder %s28, 0
      %p151 = por %p149, %p150
      %s153 = sadd.s32 %s152, 1
      %p156 = scmp.eq.s32.totalorder %s22, 1
      %p157 = scmp.ne.s32.totalorder %s152, %s154
      %p158 = scmp.eq.s32.totalorder %s22, 0
      %p159 = por %p157, %p158
      %p160 = scmp.ne.s32.totalorder %s152, %s154
      %p161 = scmp.eq.s32.totalorder %s27, 1
      %p162 = por %p160, %p161
      %p163 = scmp.ne.s32.totalorder %s154, %s155
      %p164 = scmp.eq.s32.totalorder %s27, 0
      %p165 = por %p163, %p164
      %p166 = scmp.ne.s32.totalorder %s154, %s155
      %p167 = scmp.eq.s32.totalorder %s28, 1
      %p168 = por %p166, %p167
      %p170 = scmp.ne.s32.totalorder %s155, %s169
      %p171 = scmp.eq.s32.totalorder %s28, 0
      %p172 = por %p170, %p171
      %s174 = sadd.s32 %s173, 1
      %p177 = scmp.eq.s32.totalorder %s22, 1
      %p178 = scmp.ne.s32.totalorder %s173, %s175
      %p179 = scmp.eq.s32.totalorder %s22, 0
      %p180 = por %p178, %p179
      %p181 = scmp.ne.s32.totalorder %s173, %s175
      %p182 = scmp.eq.s32.totalorder %s27, 1
      %p183 = por %p181, %p182
      %p184 = scmp.ne.s32.totalorder %s175, %s176
      %p185 = scmp.eq.s32.totalorder %s27, 0
      %p186 = por %p184, %p185
      %p187 = scmp.ne.s32.totalorder %s175, %s176
      %p188 = scmp.eq.s32.totalorder %s28, 1
      %p189 = por %p187, %p188
      %p191 = scmp.ne.s32.totalorder %s176, %s190
      %p192 = scmp.eq.s32.totalorder %s28, 0
      %p193 = por %p191, %p192
      %s195 = sadd.s32 %s194, 1
      %p198 = scmp.eq.s32.totalorder %s22, 1
      %p199 = scmp.ne.s32.totalorder %s194, %s196
      %p200 = scmp.eq.s32.totalorder %s22, 0
      %p201 = por %p199, %p200
      %p202 = scmp.ne.s32.totalorder %s194, %s196
      %p203 = scmp.eq.s32.totalorder %s27, 1
      %p204 = por %p202, %p203
      %p205 = scmp.ne.s32.totalorder %s196, %s197
      %p206 = scmp.eq.s32.totalorder %s27, 0
      %p207 = por %p205, %p206
      %p208 = scmp.ne.s32.totalorder %s196, %s197
      %p209 = scmp.eq.s32.totalorder %s28, 1
      %p210 = por %p208, %p209
      %p212 = scmp.ne.s32.totalorder %s197, %s211
      %p213 = scmp.eq.s32.totalorder %s28, 0
      %p214 = por %p212, %p213
      %s216 = sadd.s32 %s215, 1
      %p219 = scmp.eq.s32.totalorder %s22, 1
      %p220 = scmp.ne.s32.totalorder %s215, %s217
      %p221 = scmp.eq.s32.totalorder %s22, 0
      %p222 = por %p220, %p221
      %p223 = scmp.ne.s32.totalorder %s215, %s217
      %p224 = scmp.eq.s32.totalorder %s27, 1
      %p225 = por %p223, %p224
      %p226 = scmp.ne.s32.totalorder %s217, %s218
      %p227 = scmp.eq.s32.totalorder %s27, 0
      %p228 = por %p226, %p227
      %p229 = scmp.ne.s32.totalorder %s217, %s218
      %p230 = scmp.eq.s32.totalorder %s28, 1
      %p231 = por %p229, %p230
      %p233 = scmp.ne.s32.totalorder %s218, %s232
      %p234 = scmp.eq.s32.totalorder %s28, 0
      %p235 = por %p233, %p234
      %s237 = sadd.s32 %s236, 1
      %p240 = scmp.eq.s32.totalorder %s22, 1
      %p241 = scmp.ne.s32.totalorder %s236, %s238
      %p242 = scmp.eq.s32.totalorder %s22, 0
      %p243 = por %p241, %p242
      %p244 = scmp.ne.s32.totalorder %s236, %s238
      %p245 = scmp.eq.s32.totalorder %s27, 1
      %p246 = por %p244, %p245
      %p247 = scmp.ne.s32.totalorder %s238, %s239
      %p248 = scmp.eq.s32.totalorder %s27, 0
      %p249 = por %p247, %p248
      %p250 = scmp.ne.s32.totalorder %s238, %s239
      %p251 = scmp.eq.s32.totalorder %s28, 1
      %p252 = por %p250, %p251
      %p254 = scmp.ne.s32.totalorder %s239, %s253
      %p255 = scmp.eq.s32.totalorder %s28, 0
      %p256 = por %p254, %p255
      %s258 = sadd.s32 %s257, 1
      %p261 = scmp.eq.s32.totalorder %s22, 1
      %p262 = scmp.ne.s32.totalorder %s257, %s259
      %p263 = scmp.eq.s32.totalorder %s22, 0
      %p264 = por %p262, %p263
      %p265 = scmp.ne.s32.totalorder %s257, %s259
      %p266 = scmp.eq.s32.totalorder %s27, 1
      %p267 = por %p265, %p266
      %p268 = scmp.ne.s32.totalorder %s259, %s260
      %p269 = scmp.eq.s32.totalorder %s27, 0
      %p270 = por %p268, %p269
      %p271 = scmp.ne.s32.totalorder %s259, %s260
      %p272 = scmp.eq.s32.totalorder %s28, 1
      %p273 = por %p271, %p272
      %p275 = scmp.ne.s32.totalorder %s260, %s274
      %p276 = scmp.eq.s32.totalorder %s28, 0
      %p277 = por %p275, %p276
      %s279 = sadd.s32 %s278, 1
      %p282 = scmp.eq.s32.totalorder %s22, 1
      %p283 = scmp.ne.s32.totalorder %s278, %s280
      %p284 = scmp.eq.s32.totalorder %s22, 0
      %p285 = por %p283, %p284
      %p286 = scmp.ne.s32.totalorder %s278, %s280
      %p287 = scmp.eq.s32.totalorder %s27, 1
      %p288 = por %p286, %p287
      %p289 = scmp.ne.s32.totalorder %s280, %s281
      %p290 = scmp.eq.s32.totalorder %s27, 0
      %p291 = por %p289, %p290
      %p292 = scmp.ne.s32.totalorder %s280, %s281
      %p293 = scmp.eq.s32.totalorder %s28, 1
      %p294 = por %p292, %p293
      %p296 = scmp.ne.s32.totalorder %s281, %s295
      %p297 = scmp.eq.s32.totalorder %s28, 0
      %p298 = por %p296, %p297
      %s300 = sadd.s32 %s299, 1
      %p303 = scmp.eq.s32.totalorder %s22, 1
      %p304 = scmp.ne.s32.totalorder %s299, %s301
      %p305 = scmp.eq.s32.totalorder %s22, 0
      %p306 = por %p304, %p305
      %p307 = scmp.ne.s32.totalorder %s299, %s301
      %p308 = scmp.eq.s32.totalorder %s27, 1
      %p309 = por %p307, %p308
      %p310 = scmp.ne.s32.totalorder %s301, %s302
      %p311 = scmp.eq.s32.totalorder %s27, 0
      %p312 = por %p310, %p311
      %p313 = scmp.ne.s32.totalorder %s301, %s302
      %p314 = scmp.eq.s32.totalorder %s28, 1
      %p315 = por %p313, %p314
      %p317 = scmp.ne.s32.totalorder %s302, %s316
      %p318 = scmp.eq.s32.totalorder %s28, 0
      %p319 = por %p317, %p318
      %s320 = ssub.s32 %s29, %s41
      %s321 = ssub.s32 %s30, %s37
      %s322 = sor.u32 %s320, %s321
      %p323 = scmp.eq.s32.totalorder %s322, 0
      %s325 = sadd.s32 %s324, 1
      %s326 = scalar_select %p323, %s324, %s325
      %p329 = pneg %p323
      %p330 = scmp.eq.s32.totalorder %s22, 1
      %p331 = por %p329, %p330
      %p332 = scmp.ne.s32.totalorder %s324, %s327
      %p333 = scmp.eq.s32.totalorder %s22, 0
      %p334 = por %p332, %p333
      %p335 = scmp.ne.s32.totalorder %s324, %s327
      %p336 = scmp.eq.s32.totalorder %s27, 1
      %p337 = por %p335, %p336
      %p338 = scmp.ne.s32.totalorder %s327, %s328
      %p339 = scmp.eq.s32.totalorder %s27, 0
      %p340 = por %p338, %p339
      %p341 = scmp.ne.s32.totalorder %s327, %s328
      %p342 = scmp.eq.s32.totalorder %s28, 1
      %p343 = por %p341, %p342
      %p345 = scmp.ne.s32.totalorder %s328, %s344
      %p346 = scmp.eq.s32.totalorder %s28, 0
      %p347 = por %p345, %p346
      %p348 = scmp.le.s32.totalorder 1, %s22
      %p349 = scmp.lt.s32.totalorder %s22, 3
      %p350 = pnand %p348, %p349
      %p351 = pneg %p350
      // Predicated region
      $region9: #{tpu_custom_call.1} parent=5 // pred_check
        _
      $region10: #{tpu_custom_call.1} parent=5 // pred_check_branch
        %353 = sbr.rel (%p350) target = $region12
      $region11: #{tpu_custom_call.1} parent=5 // pred_region
        %s354 = ssub.s32 %s22, 1
        // Predicated region
        $region13: #{tpu_custom_call.1} parent=11 // pred_check
          %p355 = pneg %p81
        $region14: #{tpu_custom_call.1} parent=11 // pred_check_branch
          %357 = sbr.rel (%p355) target = $region16
        $region15: #{tpu_custom_call.1} parent=11 // pred_region
          _
        $region16: #{tpu_custom_call.1} parent=11 // pred_fallthru
          _
        // Predicated region
        $region17: #{tpu_custom_call.1} parent=11 // pred_check
          %p358 = pneg %p102
        $region18: #{tpu_custom_call.1} parent=11 // pred_check_branch
          %360 = sbr.rel (%p358) target = $region20
        $region19: #{tpu_custom_call.1} parent=11 // pred_region
          _
        $region20: #{tpu_custom_call.1} parent=11 // pred_fallthru
          _
        // Predicated region
        $region21: #{tpu_custom_call.1} parent=11 // pred_check
          %p361 = pneg %p123
        $region22: #{tpu_custom_call.1} parent=11 // pred_check_branch
          %363 = sbr.rel (%p361) target = $region24
        $region23: #{tpu_custom_call.1} parent=11 // pred_region
          _
        $region24: #{tpu_custom_call.1} parent=11 // pred_fallthru
          _
        // Predicated region
        $region25: #{tpu_custom_call.1} parent=11 // pred_check
          %p364 = pneg %p144
        $region26: #{tpu_custom_call.1} parent=11 // pred_check_branch
          %366 = sbr.rel (%p364) target = $region28
        $region27: #{tpu_custom_call.1} parent=11 // pred_region
          _
        $region28: #{tpu_custom_call.1} parent=11 // pred_fallthru
          _
        // Predicated region
        $region29: #{tpu_custom_call.1} parent=11 // pred_check
          %p367 = pneg %p165
        $region30: #{tpu_custom_call.1} parent=11 // pred_check_branch
          %369 = sbr.rel (%p367) target = $region32
        $region31: #{tpu_custom_call.1} parent=11 // pred_region
          _
        $region32: #{tpu_custom_call.1} parent=11 // pred_fallthru
          _
        // Predicated region
        $region33: #{tpu_custom_call.1} parent=11 // pred_check
          %p370 = pneg %p186
        $region34: #{tpu_custom_call.1} parent=11 // pred_check_branch
          %372 = sbr.rel (%p370) target = $region36
        $region35: #{tpu_custom_call.1} parent=11 // pred_region
          _
        $region36: #{tpu_custom_call.1} parent=11 // pred_fallthru
          _
        // Predicated region
        $region37: #{tpu_custom_call.1} parent=11 // pred_check
          %p373 = pneg %p207
        $region38: #{tpu_custom_call.1} parent=11 // pred_check_branch
          %375 = sbr.rel (%p373) target = $region40
        $region39: #{tpu_custom_call.1} parent=11 // pred_region
          _
        $region40: #{tpu_custom_call.1} parent=11 // pred_fallthru
          _
        // Predicated region
        $region41: #{tpu_custom_call.1} parent=11 // pred_check
          %p376 = pneg %p228
        $region42: #{tpu_custom_call.1} parent=11 // pred_check_branch
          %378 = sbr.rel (%p376) target = $region44
        $region43: #{tpu_custom_call.1} parent=11 // pred_region
          _
        $region44: #{tpu_custom_call.1} parent=11 // pred_fallthru
          _
        // Predicated region
        $region45: #{tpu_custom_call.1} parent=11 // pred_check
          %p379 = pneg %p249
        $region46: #{tpu_custom_call.1} parent=11 // pred_check_branch
          %381 = sbr.rel (%p379) target = $region48
        $region47: #{tpu_custom_call.1} parent=11 // pred_region
          _
        $region48: #{tpu_custom_call.1} parent=11 // pred_fallthru
          _
        // Predicated region
        $region49: #{tpu_custom_call.1} parent=11 // pred_check
          %p382 = pneg %p270
        $region50: #{tpu_custom_call.1} parent=11 // pred_check_branch
          %384 = sbr.rel (%p382) target = $region52
        $region51: #{tpu_custom_call.1} parent=11 // pred_region
          _
        $region52: #{tpu_custom_call.1} parent=11 // pred_fallthru
          _
        // Predicated region
        $region53: #{tpu_custom_call.1} parent=11 // pred_check
          %p385 = pneg %p291
        $region54: #{tpu_custom_call.1} parent=11 // pred_check_branch
          %387 = sbr.rel (%p385) target = $region56
        $region55: #{tpu_custom_call.1} parent=11 // pred_region
          _
        $region56: #{tpu_custom_call.1} parent=11 // pred_fallthru
          _
        // Predicated region
        $region57: #{tpu_custom_call.1} parent=11 // pred_check
          %p388 = pneg %p312
        $region58: #{tpu_custom_call.1} parent=11 // pred_check_branch
          %390 = sbr.rel (%p388) target = $region60
        $region59: #{tpu_custom_call.1} parent=11 // pred_region
          _
        $region60: #{tpu_custom_call.1} parent=11 // pred_fallthru
          _
      $region12: #{tpu_custom_call.1} parent=5 // pred_fallthru
        _
      %p391 = scmp.lt.s32.totalorder %s22, 2
      // Predicated region
      $region61: #{tpu_custom_call.1} parent=5 // pred_check
        %p392 = pneg %p391
      $region62: #{tpu_custom_call.1} parent=5 // pred_check_branch
        %394 = sbr.rel (%p392) target = $region64
      $region63: #{tpu_custom_call.1} parent=5 // pred_region
        // Predicated region
        $region65: #{tpu_custom_call.1} parent=63 // pred_check
          %p395 = pneg %p54
        $region66: #{tpu_custom_call.1} parent=63 // pred_check_branch
          %397 = sbr.rel (%p395) target = $region68
        $region67: #{tpu_custom_call.1} parent=63 // pred_region
          %p398 = scmp.lt.s32.totalorder %s29, 1
          %s399 = scalar_select %p398, %s29, 1
          %s400 = smul.addr %s399, 8
          %s401 = scalar_lea.vmem %s0, %s400
        $region68: #{tpu_custom_call.1} parent=63 // pred_fallthru
          _
      $region64: #{tpu_custom_call.1} parent=5 // pred_fallthru
        _
      %p402 = scmp.le.s32.totalorder 1, %s22
      %p403 = scmp.lt.s32.totalorder %s22, 3
      %p404 = pnand %p402, %p403
      %p405 = pneg %p404
      // Predicated region
      $region69: #{tpu_custom_call.1} parent=5 // pred_check
        _
      $region70: #{tpu_custom_call.1} parent=5 // pred_check_branch
        %407 = sbr.rel (%p404) target = $region72
      $region71: #{tpu_custom_call.1} parent=5 // pred_region
        %s408 = ssub.s32 %s22, 1
        %p409 = scmp.lt.s32.totalorder %s31, 1
        %s410 = scalar_select %p409, %s31, 1
        %s411 = smul.addr %s410, 8
        %s412 = scalar_lea.vmem %s0, %s411
        %p413 = pneg %p60
        %p414 = pneg %p57
        %p415 = pneg %p81
        %p416 = pneg %p78
        %p417 = pneg %p102
        %p418 = pneg %p99
        %p419 = pneg %p123
        %p420 = pneg %p120
        %p421 = pneg %p144
        %p422 = pneg %p141
        %p423 = pneg %p165
        %p424 = pneg %p162
        %p425 = pneg %p186
        %p426 = pneg %p183
        %p427 = pneg %p207
        %p428 = pneg %p204
        %p429 = pneg %p228
        %p430 = pneg %p225
        %p431 = pneg %p249
        %p432 = pneg %p246
        %p433 = pneg %p270
        %p434 = pneg %p267
        %p435 = pneg %p291
        %p436 = pneg %p288
        %p437 = pneg %p312
        %p438 = pneg %p309
        %p439 = pneg %p340
        %p440 = pneg %p337
        %s441 = sand.u32 %s327, 1
        %s442 = scalar_lea.sflag [#allocation4], %s441
        %s443 = sand.u32 %s327, 1
        %s444 = smul.addr %s443, 8
        %s445 = scalar_lea.vmem [#allocation3], %s444
        %p446 = scmp.lt.s32.totalorder %s31, 1
        %s447 = scalar_select %p446, %s31, 1
        %s448 = smul.addr %s447, 8
        %s449 = scalar_lea.vmem %s0, %s448
        %p451 = scmp.eq.s32.totalorder %s32, 0
        // Predicated region
        $region73: #{tpu_custom_call.1} parent=71 // pred_check
          %p452 = pneg %p451
        $region74: #{tpu_custom_call.1} parent=71 // pred_check_branch
          %454 = sbr.rel (%p452) target = $region76
        $region75: #{tpu_custom_call.1} parent=71 // pred_region
          %v455 = vld [vmem:[%s449] sm:$0xff]
          %v456 = vld [vmem:[%s1] sm:$0x1]
          %v457 = vld [vmem:[%s2] sm:$0x1]
          %vm458 = vcmask 261120
          %v459 = vsel %vm458, %v455, 0.0
          %460 = vadd.xlane.f32.xlu0 %v459
          %v461 = vpop.xlane.xlu0 %460
          %v462 = vrcp.pop 32.0
          %v463 = vmul.f32 %v461, %v462
          %v464 = vsub.f32 %v455, %v463
          %v465 = vmul.f32 %v464, %v464
          %v466 = vsel %vm458, %v465, 0.0
          %467 = vadd.xlane.f32.xlu0 %v466
          %v468 = vpop.xlane.xlu0 %467
          %v469 = vmul.f32 %v468, %v462
          %v470 = vadd.f32 %v469, 1e-05
          %v471 = vrsqrt.pop %v470
          %v472 = vmul.f32 %v464, %v471
          %v474 = vlaneseq
          %v475 = vshrl.u32 %v474, 7
          %v476 = vsub.s32 0, %v475
          %v477 = vrot.slane %v456, %v476
          %v479 = vmul.f32 %v472, %v477
          %v481 = vlaneseq
          %v482 = vshrl.u32 %v481, 7
          %v483 = vsub.s32 0, %v482
          %v484 = vrot.slane %v457, %v483
          %v486 = vadd.f32 %v479, %v484
          %v487 = vpack.c.bf16 %v486, %v486
          %v488 = vld [vmem:[%s3] sm:$0xf]
          %v489 = vld [vmem:[%s3 + $0x4] sm:$0xf]
          %v490 = vld [vmem:[%s3 + $0x8] sm:$0xf]
          %v491 = vld [vmem:[%s3 + $0xc] sm:$0xf]
          %v492 = vld [vmem:[%s4] sm:$0x1]
          %v494 = vlaneseq
          %v495 = vshrl.u32 %v494, 7
          %v496 = vsub.s32 0, %v495
          %v497 = vrot.slane %v492, %v496
          %v503 = vunpack.c.l.b16 %v488
          %v504 = vunpack.c.l.b16 %v489
          %v505 = vunpack.c.l.b16 %v490
          %v506 = vunpack.c.l.b16 %v491
          %v507 = vpack.c.b16 %v504, %v503
          %v508 = vpack.c.b16 %v506, %v505
          %v512 = vsel %vm458, %v487, 0
          %514 = vmatprep.subr.bf16.mxu0 0
          %515 = vmatpush1.bf16.msra.mxu0 %v507
          %516 = vmatprep.subr.bf16.mxu0 0
          %517 = vmatpush1.bf16.msra.mxu0 %v508
          %518 = vmatprep.subr.bf16.mxu0 0
          %519 = vmatpush1.bf16.msra.mxu0 0
          %520 = vmatprep.subr.bf16.mxu0 0
          %521 = vmatpush1.bf16.msra.mxu0 0
          %522 = vmatprep.subr.bf16.mxu0 0
          %523 = vmatpush1.bf16.msra.mxu0 0
          %524 = vmatprep.subr.bf16.mxu0 0
          %525 = vmatpush1.bf16.msra.mxu0 0
          %526 = vmatprep.subr.bf16.mxu0 0
          %527 = vmatpush1.bf16.msra.mxu0 0
          %528 = vmatprep.subr.bf16.mxu0 0
          %529 = vmatpush1.bf16.msra.mxu0 0
          %530 = vmatprep.subr.bf16.mxu0 0
          %531 = vmatpush1.bf16.msra.mxu0 0
          %532 = vmatprep.subr.bf16.mxu0 0
          %533 = vmatpush1.bf16.msra.mxu0 0
          %534 = vmatprep.subr.bf16.mxu0 0
          %535 = vmatpush1.bf16.msra.mxu0 0
          %536 = vmatprep.subr.bf16.mxu0 0
          %537 = vmatpush1.bf16.msra.mxu0 0
          %538 = vmatprep.subr.bf16.mxu0 0
          %539 = vmatpush1.bf16.msra.mxu0 0
          %540 = vmatprep.subr.bf16.mxu0 0
          %541 = vmatpush1.bf16.msra.mxu0 0
          %542 = vmatprep.subr.bf16.mxu0 0
          %543 = vmatpush1.bf16.msra.mxu0 0
          %544 = vmatprep.subr.bf16.mxu0 0
          %545 = vmatpush1.bf16.msra.mxu0 0
          %546 = vmatprep.mubr.bf16.mxu0 0
          %547 = vmatmul.mubr.bf16.gmra.mrb[0].mxu0 %v512
          %v548 = vpop.f32.mrb[0].mxu0
          %v549 = vadd.f32 %v497, %v548
          %v550 = vpop.f32.mrb[0].mxu0
          %v551 = vpop.f32.mrb[0].mxu0
          %v552 = vpop.f32.mrb[0].mxu0
          %553 = vdwg.mxu0
          %v554 = vpack.c.bf16 %v549, %v549
          %vm555 = vcmask 781312
          %556 = vst.msk [vmem:[#allocation2] sm:$0xf] %vm555, %v554
        $region76: #{tpu_custom_call.1} parent=71 // pred_fallthru
          _
        %s557 = smul.u32 %s32, 8
        %s558 = scalar_lea.vmem %s449, %s557
        %v559 = vld [vmem:[%s558] sm:$0xff]
        %s560 = sshra.s32 %s557, 3
        %s561 = sand.u32 %s557, 7
        %s562 = smul.addr %s560, 4
        %s563 = scalar_lea.vmem [#allocation2], %s562
        %v564 = vld [vmem:[%s563] sm:$0xf]
        %v565 = vld [vmem:[#allocation2] sm:$0xf]
        %v567 = vunpack.c.l.b16 %v565
        %v568 = vpack.c.b16 %v567, %v567
        %569 = vrot.lane.b32.xlu0 %v568, 96
        %v570 = vpop.permute.xlu0 %569
        %vm571 = vcmask 64512
        %v573 = vsel %vm571, %v564, 0
        %v576 = vsel %vm571, %v570, 0
        %578 = vmatprep.subr.bf16.mxu0 0
        %579 = vmatpush1.bf16.xpose.msra.mxu0 %v576
        %580 = vmatprep.subr.bf16.mxu0 0
        %581 = vmatpush1.bf16.xpose.msra.mxu0 0
        %582 = vmatprep.subr.bf16.mxu0 0
        %583 = vmatpush1.bf16.xpose.msra.mxu0 0
        %584 = vmatprep.subr.bf16.mxu0 0
        %585 = vmatpush1.bf16.xpose.msra.mxu0 0
        %586 = vmatprep.subr.bf16.mxu0 0
        %587 = vmatpush1.bf16.xpose.msra.mxu0 0
        %588 = vmatprep.subr.bf16.mxu0 0
        %589 = vmatpush1.bf16.xpose.msra.mxu0 0
        %590 = vmatprep.subr.bf16.mxu0 0
        %591 = vmatpush1.bf16.xpose.msra.mxu0 0
        %592 = vmatprep.subr.bf16.mxu0 0
        %593 = vmatpush1.bf16.xpose.msra.mxu0 0
        %594 = vmatprep.subr.bf16.mxu0 0
        %595 = vmatpush1.bf16.xpose.msra.mxu0 0
        %596 = vmatprep.subr.bf16.mxu0 0
        %597 = vmatpush1.bf16.xpose.msra.mxu0 0
        %598 = vmatprep.subr.bf16.mxu0 0
        %599 = vmatpush1.bf16.xpose.msra.mxu0 0
        %600 = vmatprep.subr.bf16.mxu0 0
        %601 = vmatpush1.bf16.xpose.msra.mxu0 0
        %602 = vmatprep.subr.bf16.mxu0 0
        %603 = vmatpush1.bf16.xpose.msra.mxu0 0
        %604 = vmatprep.subr.bf16.mxu0 0
        %605 = vmatpush1.bf16.xpose.msra.mxu0 0
        %606 = vmatprep.subr.bf16.mxu0 0
        %607 = vmatpush1.bf16.xpose.msra.mxu0 0
        %608 = vmatprep.subr.bf16.mxu0 0
        %609 = vmatpush1.bf16.xpose.msra.mxu0 0
        %610 = vmatprep.mubr.bf16.mxu0 0
        %611 = vmatmul.mubr.bf16.gmra.mrb[0].mxu0 %v573
        %v612 = vpop.f32.mrb[0].mxu0
        %v613 = vadd.f32 0.0, %v612
        %v614 = vpop.f32.mrb[0].mxu0
        %v615 = vpop.f32.mrb[0].mxu0
        %v616 = vpop.f32.mrb[0].mxu0
        %617 = vdwg.mxu0
        %v618 = vsel %vm571, %v613, -inf
        %619 = vmax.xlane.f32.xlu0 %v618
        %v620 = vpop.xlane.xlu0 %619
        %v621 = vsub.f32 %v613, %v620
        %v622 = vmul.f32 %v621, 1.442695
        %v623 = vpow.pop %v622
        %v624 = vsel %vm571, %v623, 0.0
        %625 = vadd.xlane.f32.xlu0 %v624
        %v626 = vpop.xlane.xlu0 %625
        %v627 = vpack.c.bf16 %v623, %v623
        %628 = vrot.lane.b32.xlu0 %v568, 64
        %v629 = vpop.permute.xlu0 %628
        %v631 = vsel %vm571, %v627, 0
        %vm633 = vcmask 1043456
        %v635 = vsel %vm633, %v629, 0
        %637 = vmatprep.subr.bf16.mxu0 0
        %638 = vmatpush1.bf16.msra.mxu0 %v635
        %639 = vmatprep.subr.bf16.mxu0 0
        %640 = vmatpush1.bf16.msra.mxu0 0
        %641 = vmatprep.subr.bf16.mxu0 0
        %642 = vmatpush1.bf16.msra.mxu0 0
        %643 = vmatprep.subr.bf16.mxu0 0
        %644 = vmatpush1.bf16.msra.mxu0 0
        %645 = vmatprep.subr.bf16.mxu0 0
        %646 = vmatpush1.bf16.msra.mxu0 0
        %647 = vmatprep.subr.bf16.mxu0 0
        %648 = vmatpush1.bf16.msra.mxu0 0
        %649 = vmatprep.subr.bf16.mxu0 0
        %650 = vmatpush1.bf16.msra.mxu0 0
        %651 = vmatprep.subr.bf16.mxu0 0
        %652 = vmatpush1.bf16.msra.mxu0 0
        %653 = vmatprep.subr.bf16.mxu0 0
        %654 = vmatpush1.bf16.msra.mxu0 0
        %655 = vmatprep.subr.bf16.mxu0 0
        %656 = vmatpush1.bf16.msra.mxu0 0
        %657 = vmatprep.subr.bf16.mxu0 0
        %658 = vmatpush1.bf16.msra.mxu0 0
        %659 = vmatprep.subr.bf16.mxu0 0
        %660 = vmatpush1.bf16.msra.mxu0 0
        %661 = vmatprep.subr.bf16.mxu0 0
        %662 = vmatpush1.bf16.msra.mxu0 0
        %663 = vmatprep.subr.bf16.mxu0 0
        %664 = vmatpush1.bf16.msra.mxu0 0
        %665 = vmatprep.subr.bf16.mxu0 0
        %666 = vmatpush1.bf16.msra.mxu0 0
        %667 = vmatprep.subr.bf16.mxu0 0
        %668 = vmatpush1.bf16.msra.mxu0 0
        %669 = vmatprep.mubr.bf16.mxu0 0
        %670 = vmatmul.mubr.bf16.gmra.mrb[0].mxu0 %v631
        %v671 = vpop.f32.mrb[0].mxu0
        %v672 = vadd.f32 0.0, %v671
        %v673 = vpop.f32.mrb[0].mxu0
        %v674 = vpop.f32.mrb[0].mxu0
        %v675 = vpop.f32.mrb[0].mxu0
        %676 = vdwg.mxu0
        %v677 = vrcp.pop %v626
        %v678 = vmul.f32 %v672, %v677
        %v679 = vpack.c.bf16 %v678, %v678
        %v680 = vld [vmem:[%s5] sm:$0xf]
        %v682 = vunpack.c.l.b16 %v564
        %v683 = vpack.c.b16 %v682, %v682
        %684 = vrot.lane.b32.xlu0 %v683, 120
        %v685 = vpop.permute.xlu0 %684
        %686 = vrot.lane.b32.xlu0 %v568, 88
        %v687 = vpop.permute.xlu0 %686
        %v689 = vsel %vm571, %v685, 0
        %v692 = vsel %vm571, %v687, 0
        %694 = vmatprep.subr.bf16.mxu0 0
        %695 = vmatpush1.bf16.xpose.msra.mxu0 %v692
        %696 = vmatprep.subr.bf16.mxu0 0
        %697 = vmatpush1.bf16.xpose.msra.mxu0 0
        %698 = vmatprep.subr.bf16.mxu0 0
        %699 = vmatpush1.bf16.xpose.msra.mxu0 0
        %700 = vmatprep.subr.bf16.mxu0 0
        %701 = vmatpush1.bf16.xpose.msra.mxu0 0
        %702 = vmatprep.subr.bf16.mxu0 0
        %703 = vmatpush1.bf16.xpose.msra.mxu0 0
        %704 = vmatprep.subr.bf16.mxu0 0
        %705 = vmatpush1.bf16.xpose.msra.mxu0 0
        %706 = vmatprep.subr.bf16.mxu0 0
        %707 = vmatpush1.bf16.xpose.msra.mxu0 0
        %708 = vmatprep.subr.bf16.mxu0 0
        %709 = vmatpush1.bf16.xpose.msra.mxu0 0
        %710 = vmatprep.subr.bf16.mxu0 0
        %711 = vmatpush1.bf16.xpose.msra.mxu0 0
        %712 = vmatprep.subr.bf16.mxu0 0
        %713 = vmatpush1.bf16.xpose.msra.mxu0 0
        %714 = vmatprep.subr.bf16.mxu0 0
        %715 = vmatpush1.bf16.xpose.msra.mxu0 0
        %716 = vmatprep.subr.bf16.mxu0 0
        %717 = vmatpush1.bf16.xpose.msra.mxu0 0
        %718 = vmatprep.subr.bf16.mxu0 0
        %719 = vmatpush1.bf16.xpose.msra.mxu0 0
        %720 = vmatprep.subr.bf16.mxu0 0
        %721 = vmatpush1.bf16.xpose.msra.mxu0 0
        %722 = vmatprep.subr.bf16.mxu0 0
        %723 = vmatpush1.bf16.xpose.msra.mxu0 0
        %724 = vmatprep.subr.bf16.mxu0 0
        %725 = vmatpush1.bf16.xpose.msra.mxu0 0
        %726 = vmatprep.mubr.bf16.mxu0 0
        %727 = vmatmul.mubr.bf16.gmra.mrb[0].mxu0 %v689
        %v728 = vpop.f32.mrb[0].mxu0
        %v729 = vadd.f32 0.0, %v728
        %v730 = vpop.f32.mrb[0].mxu0
        %v731 = vpop.f32.mrb[0].mxu0
        %v732 = vpop.f32.mrb[0].mxu0
        %733 = vdwg.mxu0
        %v734 = vsel %vm571, %v729, -inf
        %735 = vmax.xlane.f32.xlu0 %v734
        %v736 = vpop.xlane.xlu0 %735
        %v737 = vsub.f32 %v729, %v736
        %v738 = vmul.f32 %v737, 1.442695
        %v739 = vpow.pop %v738
        %v740 = vsel %vm571, %v739, 0.0
        %741 = vadd.xlane.f32.xlu0 %v740
        %v742 = vpop.xlane.xlu0 %741
        %v743 = vpack.c.bf16 %v739, %v739
        %744 = vrot.lane.b32.xlu0 %v568, 56
        %v745 = vpop.permute.xlu0 %744
        %v747 = vsel %vm571, %v743, 0
        %v750 = vsel %vm633, %v745, 0
        %752 = vmatprep.subr.bf16.mxu0 0
        %753 = vmatpush1.bf16.msra.mxu0 %v750
        %754 = vmatprep.subr.bf16.mxu0 0
        %755 = vmatpush1.bf16.msra.mxu0 0
        %756 = vmatprep.subr.bf16.mxu0 0
        %757 = vmatpush1.bf16.msra.mxu0 0
        %758 = vmatprep.subr.bf16.mxu0 0
        %759 = vmatpush1.bf16.msra.mxu0 0
        %760 = vmatprep.subr.bf16.mxu0 0
        %761 = vmatpush1.bf16.msra.mxu0 0
        %762 = vmatprep.subr.bf16.mxu0 0
        %763 = vmatpush1.bf16.msra.mxu0 0
        %764 = vmatprep.subr.bf16.mxu0 0
        %765 = vmatpush1.bf16.msra.mxu0 0
        %766 = vmatprep.subr.bf16.mxu0 0
        %767 = vmatpush1.bf16.msra.mxu0 0
        %768 = vmatprep.subr.bf16.mxu0 0
        %769 = vmatpush1.bf16.msra.mxu0 0
        %770 = vmatprep.subr.bf16.mxu0 0
        %771 = vmatpush1.bf16.msra.mxu0 0
        %772 = vmatprep.subr.bf16.mxu0 0
        %773 = vmatpush1.bf16.msra.mxu0 0
        %774 = vmatprep.subr.bf16.mxu0 0
        %775 = vmatpush1.bf16.msra.mxu0 0
        %776 = vmatprep.subr.bf16.mxu0 0
        %777 = vmatpush1.bf16.msra.mxu0 0
        %778 = vmatprep.subr.bf16.mxu0 0
        %779 = vmatpush1.bf16.msra.mxu0 0
        %780 = vmatprep.subr.bf16.mxu0 0
        %781 = vmatpush1.bf16.msra.mxu0 0
        %782 = vmatprep.subr.bf16.mxu0 0
        %783 = vmatpush1.bf16.msra.mxu0 0
        %784 = vmatprep.mubr.bf16.mxu0 0
        %785 = vmatmul.mubr.bf16.gmra.mrb[0].mxu0 %v747
        %v786 = vpop.f32.mrb[0].mxu0
        %v787 = vadd.f32 0.0, %v786
        %v788 = vpop.f32.mrb[0].mxu0
        %v789 = vpop.f32.mrb[0].mxu0
        %v790 = vpop.f32.mrb[0].mxu0
        %791 = vdwg.mxu0
        %v792 = vrcp.pop %v742
        %v793 = vmul.f32 %v787, %v792
        %v794 = vpack.c.bf16 %v793, %v793
        %v795 = vld [vmem:[%s5 + $0x4] sm:$0xf]
        %v797 = vsel %vm571, %v794, 0
        %v800 = vsel %vm633, %v795, 0
        %802 = vmatprep.subr.bf16.mxu0 0
        %803 = vmatpush1.bf16.msra.mxu0 %v800
        %804 = vmatprep.subr.bf16.mxu0 0
        %805 = vmatpush1.bf16.msra.mxu0 0
        %806 = vmatprep.subr.bf16.mxu0 0
        %807 = vmatpush1.bf16.msra.mxu0 0
        %808 = vmatprep.subr.bf16.mxu0 0
        %809 = vmatpush1.bf16.msra.mxu0 0
        %810 = vmatprep.subr.bf16.mxu0 0
        %811 = vmatpush1.bf16.msra.mxu0 0
        %812 = vmatprep.subr.bf16.mxu0 0
        %813 = vmatpush1.bf16.msra.mxu0 0
        %814 = vmatprep.subr.bf16.mxu0 0
        %815 = vmatpush1.bf16.msra.mxu0 0
        %816 = vmatprep.subr.bf16.mxu0 0
        %817 = vmatpush1.bf16.msra.mxu0 0
        %818 = vmatprep.subr.bf16.mxu0 0
        %819 = vmatpush1.bf16.msra.mxu0 0
        %820 = vmatprep.subr.bf16.mxu0 0
        %821 = vmatpush1.bf16.msra.mxu0 0
        %822 = vmatprep.subr.bf16.mxu0 0
        %823 = vmatpush1.bf16.msra.mxu0 0
        %824 = vmatprep.subr.bf16.mxu0 0
        %825 = vmatpush1.bf16.msra.mxu0 0
        %826 = vmatprep.subr.bf16.mxu0 0
        %827 = vmatpush1.bf16.msra.mxu0 0
        %828 = vmatprep.subr.bf16.mxu0 0
        %829 = vmatpush1.bf16.msra.mxu0 0
        %830 = vmatprep.subr.bf16.mxu0 0
        %831 = vmatpush1.bf16.msra.mxu0 0
        %832 = vmatprep.subr.bf16.mxu0 0
        %833 = vmatpush1.bf16.msra.mxu0 0
        %834 = vmatprep.mubr.bf16.mxu0 0
        %835 = vmatmul.mubr.bf16.gmra.mrb[0].mxu0 %v797
        %v836 = vpop.f32.mrb[0].mxu0
        %v837 = vadd.f32 0.0, %v836
        %v838 = vpop.f32.mrb[0].mxu0
        %v839 = vpop.f32.mrb[0].mxu0
        %v840 = vpop.f32.mrb[0].mxu0
        %841 = vdwg.mxu0
        %v843 = vsel %vm571, %v679, 0
        %v846 = vsel %vm633, %v680, 0
        %848 = vmatprep.subr.bf16.mxu0 0
        %849 = vmatpush1.bf16.msra.mxu0 %v846
        %850 = vmatprep.subr.bf16.mxu0 0
        %851 = vmatpush1.bf16.msra.mxu0 0
        %852 = vmatprep.subr.bf16.mxu0 0
        %853 = vmatpush1.bf16.msra.mxu0 0
        %854 = vmatprep.subr.bf16.mxu0 0
        %855 = vmatpush1.bf16.msra.mxu0 0
        %856 = vmatprep.subr.bf16.mxu0 0
        %857 = vmatpush1.bf16.msra.mxu0 0
        %858 = vmatprep.subr.bf16.mxu0 0
        %859 = vmatpush1.bf16.msra.mxu0 0
        %860 = vmatprep.subr.bf16.mxu0 0
        %861 = vmatpush1.bf16.msra.mxu0 0
        %862 = vmatprep.subr.bf16.mxu0 0
        %863 = vmatpush1.bf16.msra.mxu0 0
        %864 = vmatprep.subr.bf16.mxu0 0
        %865 = vmatpush1.bf16.msra.mxu0 0
        %866 = vmatprep.subr.bf16.mxu0 0
        %867 = vmatpush1.bf16.msra.mxu0 0
        %868 = vmatprep.subr.bf16.mxu0 0
        %869 = vmatpush1.bf16.msra.mxu0 0
        %870 = vmatprep.subr.bf16.mxu0 0
        %871 = vmatpush1.bf16.msra.mxu0 0
        %872 = vmatprep.subr.bf16.mxu0 0
        %873 = vmatpush1.bf16.msra.mxu0 0
        %874 = vmatprep.subr.bf16.mxu0 0
        %875 = vmatpush1.bf16.msra.mxu0 0
        %876 = vmatprep.subr.bf16.mxu0 0
        %877 = vmatpush1.bf16.msra.mxu0 0
        %878 = vmatprep.subr.bf16.mxu0 0
        %879 = vmatpush1.bf16.msra.mxu0 0
        %880 = vmatprep.mubr.bf16.mxu0 0
        %881 = vmatmul.mubr.bf16.gmra.mrb[0].mxu0 %v843
        %v882 = vpop.f32.mrb[0].mxu0
        %v883 = vadd.f32 %v837, %v882
        %v884 = vpop.f32.mrb[0].mxu0
        %v885 = vpop.f32.mrb[0].mxu0
        %v886 = vpop.f32.mrb[0].mxu0
        %887 = vdwg.mxu0
        %888 = vrot.lane.b32.xlu0 %v683, 112
        %v889 = vpop.permute.xlu0 %888
        %890 = vrot.lane.b32.xlu0 %v568, 80
        %v891 = vpop.permute.xlu0 %890
        %v893 = vsel %vm571, %v889, 0
        %v896 = vsel %vm571, %v891, 0
        %898 = vmatprep.subr.bf16.mxu0 0
        %899 = vmatpush1.bf16.xpose.msra.mxu0 %v896
        %900 = vmatprep.subr.bf16.mxu0 0
        %901 = vmatpush1.bf16.xpose.msra.mxu0 0
        %902 = vmatprep.subr.bf16.mxu0 0
        %903 = vmatpush1.bf16.xpose.msra.mxu0 0
        %904 = vmatprep.subr.bf16.mxu0 0
        %905 = vmatpush1.bf16.xpose.msra.mxu0 0
        %906 = vmatprep.subr.bf16.mxu0 0
        %907 = vmatpush1.bf16.xpose.msra.mxu0 0
        %908 = vmatprep.subr.bf16.mxu0 0
        %909 = vmatpush1.bf16.xpose.msra.mxu0 0
        %910 = vmatprep.subr.bf16.mxu0 0
        %911 = vmatpush1.bf16.xpose.msra.mxu0 0
        %912 = vmatprep.subr.bf16.mxu0 0
        %913 = vmatpush1.bf16.xpose.msra.mxu0 0
        %914 = vmatprep.subr.bf16.mxu0 0
        %915 = vmatpush1.bf16.xpose.msra.mxu0 0
        %916 = vmatprep.subr.bf16.mxu0 0
        %917 = vmatpush1.bf16.xpose.msra.mxu0 0
        %918 = vmatprep.subr.bf16.mxu0 0
        %919 = vmatpush1.bf16.xpose.msra.mxu0 0
        %920 = vmatprep.subr.bf16.mxu0 0
        %921 = vmatpush1.bf16.xpose.msra.mxu0 0
        %922 = vmatprep.subr.bf16.mxu0 0
        %923 = vmatpush1.bf16.xpose.msra.mxu0 0
        %924 = vmatprep.subr.bf16.mxu0 0
        %925 = vmatpush1.bf16.xpose.msra.mxu0 0
        %926 = vmatprep.subr.bf16.mxu0 0
        %927 = vmatpush1.bf16.xpose.msra.mxu0 0
        %928 = vmatprep.subr.bf16.mxu0 0
        %929 = vmatpush1.bf16.xpose.msra.mxu0 0
        %930 = vmatprep.mubr.bf16.mxu0 0
        %931 = vmatmul.mubr.bf16.gmra.mrb[0].mxu0 %v893
        %v932 = vpop.f32.mrb[0].mxu0
        %v933 = vadd.f32 0.0, %v932
        %v934 = vpop.f32.mrb[0].mxu0
        %v935 = vpop.f32.mrb[0].mxu0
        %v936 = vpop.f32.mrb[0].mxu0
        %937 = vdwg.mxu0
        %v938 = vsel %vm571, %v933, -inf
        %939 = vmax.xlane.f32.xlu0 %v938
        %v940 = vpop.xlane.xlu0 %939
        %v941 = vsub.f32 %v933, %v940
        %v942 = vmul.f32 %v941, 1.442695
        %v943 = vpow.pop %v942
        %v944 = vsel %vm571, %v943, 0.0
        %945 = vadd.xlane.f32.xlu0 %v944
        %v946 = vpop.xlane.xlu0 %945
        %v947 = vpack.c.bf16 %v943, %v943
        %948 = vrot.lane.b32.xlu0 %v568, 48
        %v949 = vpop.permute.xlu0 %948
        %v951 = vsel %vm571, %v947, 0
        %v954 = vsel %vm633, %v949, 0
        %956 = vmatprep.subr.bf16.mxu0 0
        %957 = vmatpush1.bf16.msra.mxu0 %v954
        %958 = vmatprep.subr.bf16.mxu0 0
        %959 = vmatpush1.bf16.msra.mxu0 0
        %960 = vmatprep.subr.bf16.mxu0 0
        %961 = vmatpush1.bf16.msra.mxu0 0
        %962 = vmatprep.subr.bf16.mxu0 0
        %963 = vmatpush1.bf16.msra.mxu0 0
        %964 = vmatprep.subr.bf16.mxu0 0
        %965 = vmatpush1.bf16.msra.mxu0 0
        %966 = vmatprep.subr.bf16.mxu0 0
        %967 = vmatpush1.bf16.msra.mxu0 0
        %968 = vmatprep.subr.bf16.mxu0 0
        %969 = vmatpush1.bf16.msra.mxu0 0
        %970 = vmatprep.subr.bf16.mxu0 0
        %971 = vmatpush1.bf16.msra.mxu0 0
        %972 = vmatprep.subr.bf16.mxu0 0
        %973 = vmatpush1.bf16.msra.mxu0 0
        %974 = vmatprep.subr.bf16.mxu0 0
        %975 = vmatpush1.bf16.msra.mxu0 0
        %976 = vmatprep.subr.bf16.mxu0 0
        %977 = vmatpush1.bf16.msra.mxu0 0
        %978 = vmatprep.subr.bf16.mxu0 0
        %979 = vmatpush1.bf16.msra.mxu0 0
        %980 = vmatprep.subr.bf16.mxu0 0
        %981 = vmatpush1.bf16.msra.mxu0 0
        %982 = vmatprep.subr.bf16.mxu0 0
        %983 = vmatpush1.bf16.msra.mxu0 0
        %984 = vmatprep.subr.bf16.mxu0 0
        %985 = vmatpush1.bf16.msra.mxu0 0
        %986 = vmatprep.subr.bf16.mxu0 0
        %987 = vmatpush1.bf16.msra.mxu0 0
        %988 = vmatprep.mubr.bf16.mxu0 0
        %989 = vmatmul.mubr.bf16.gmra.mrb[0].mxu0 %v951
        %v990 = vpop.f32.mrb[0].mxu0
        %v991 = vadd.f32 0.0, %v990
        %v992 = vpop.f32.mrb[0].mxu0
        %v993 = vpop.f32.mrb[0].mxu0
        %v994 = vpop.f32.mrb[0].mxu0
        %995 = vdwg.mxu0
        %v996 = vrcp.pop %v946
        %v997 = vmul.f32 %v991, %v996
        %v998 = vpack.c.bf16 %v997, %v997
        %v999 = vld [vmem:[%s5 + $0x8] sm:$0xf]
        %v1001 = vsel %vm571, %v998, 0
        %v1004 = vsel %vm633, %v999, 0
        %1006 = vmatprep.subr.bf16.mxu0 0
        %1007 = vmatpush1.bf16.msra.mxu0 %v1004
        %1008 = vmatprep.subr.bf16.mxu0 0
        %1009 = vmatpush1.bf16.msra.mxu0 0
        %1010 = vmatprep.subr.bf16.mxu0 0
        %1011 = vmatpush1.bf16.msra.mxu0 0
        %1012 = vmatprep.subr.bf16.mxu0 0
        %1013 = vmatpush1.bf16.msra.mxu0 0
        %1014 = vmatprep.subr.bf16.mxu0 0
        %1015 = vmatpush1.bf16.msra.mxu0 0
        %1016 = vmatprep.subr.bf16.mxu0 0
        %1017 = vmatpush1.bf16.msra.mxu0 0
        %1018 = vmatprep.subr.bf16.mxu0 0
        %1019 = vmatpush1.bf16.msra.mxu0 0
        %1020 = vmatprep.subr.bf16.mxu0 0
        %1021 = vmatpush1.bf16.msra.mxu0 0
        %1022 = vmatprep.subr.bf16.mxu0 0
        %1023 = vmatpush1.bf16.msra.mxu0 0
        %1024 = vmatprep.subr.bf16.mxu0 0
        %1025 = vmatpush1.bf16.msra.mxu0 0
        %1026 = vmatprep.subr.bf16.mxu0 0
        %1027 = vmatpush1.bf16.msra.mxu0 0
        %1028 = vmatprep.subr.bf16.mxu0 0
        %1029 = vmatpush1.bf16.msra.mxu0 0
        %1030 = vmatprep.subr.bf16.mxu0 0
        %1031 = vmatpush1.bf16.msra.mxu0 0
        %1032 = vmatprep.subr.bf16.mxu0 0
        %1033 = vmatpush1.bf16.msra.mxu0 0
        %1034 = vmatprep.subr.bf16.mxu0 0
        %1035 = vmatpush1.bf16.msra.mxu0 0
        %1036 = vmatprep.subr.bf16.mxu0 0
        %1037 = vmatpush1.bf16.msra.mxu0 0
        %1038 = vmatprep.mubr.bf16.mxu0 0
        %1039 = vmatmul.mubr.bf16.gmra.mrb[0].mxu0 %v1001
        %v1040 = vpop.f32.mrb[0].mxu0
        %v1041 = vadd.f32 0.0, %v1040
        %v1042 = vpop.f32.mrb[0].mxu0
        %v1043 = vpop.f32.mrb[0].mxu0
        %v1044 = vpop.f32.mrb[0].mxu0
        %1045 = vdwg.mxu0
        %v1046 = vadd.f32 %v883, %v1041
        %1047 = vrot.lane.b32.xlu0 %v683, 104
        %v1048 = vpop.permute.xlu0 %1047
        %1049 = vrot.lane.b32.xlu0 %v568, 72
        %v1050 = vpop.permute.xlu0 %1049
        %v1052 = vsel %vm571, %v1048, 0
        %v1055 = vsel %vm571, %v1050, 0
        %1057 = vmatprep.subr.bf16.mxu0 0
        %1058 = vmatpush1.bf16.xpose.msra.mxu0 %v1055
        %1059 = vmatprep.subr.bf16.mxu0 0
        %1060 = vmatpush1.bf16.xpose.msra.mxu0 0
        %1061 = vmatprep.subr.bf16.mxu0 0
        %1062 = vmatpush1.bf16.xpose.msra.mxu0 0
        %1063 = vmatprep.subr.bf16.mxu0 0
        %1064 = vmatpush1.bf16.xpose.msra.mxu0 0
        %1065 = vmatprep.subr.bf16.mxu0 0
        %1066 = vmatpush1.bf16.xpose.msra.mxu0 0
        %1067 = vmatprep.subr.bf16.mxu0 0
        %1068 = vmatpush1.bf16.xpose.msra.mxu0 0
        %1069 = vmatprep.subr.bf16.mxu0 0
        %1070 = vmatpush1.bf16.xpose.msra.mxu0 0
        %1071 = vmatprep.subr.bf16.mxu0 0
        %1072 = vmatpush1.bf16.xpose.msra.mxu0 0
        %1073 = vmatprep.subr.bf16.mxu0 0
        %1074 = vmatpush1.bf16.xpose.msra.mxu0 0
        %1075 = vmatprep.subr.bf16.mxu0 0
        %1076 = vmatpush1.bf16.xpose.msra.mxu0 0
        %1077 = vmatprep.subr.bf16.mxu0 0
        %1078 = vmatpush1.bf16.xpose.msra.mxu0 0
        %1079 = vmatprep.subr.bf16.mxu0 0
        %1080 = vmatpush1.bf16.xpose.msra.mxu0 0
        %1081 = vmatprep.subr.bf16.mxu0 0
        %1082 = vmatpush1.bf16.xpose.msra.mxu0 0
        %1083 = vmatprep.subr.bf16.mxu0 0
        %1084 = vmatpush1.bf16.xpose.msra.mxu0 0
        %1085 = vmatprep.subr.bf16.mxu0 0
        %1086 = vmatpush1.bf16.xpose.msra.mxu0 0
        %1087 = vmatprep.subr.bf16.mxu0 0
        %1088 = vmatpush1.bf16.xpose.msra.mxu0 0
        %1089 = vmatprep.mubr.bf16.mxu0 0
        %1090 = vmatmul.mubr.bf16.gmra.mrb[0].mxu0 %v1052
        %v1091 = vpop.f32.mrb[0].mxu0
        %v1092 = vadd.f32 0.0, %v1091
        %v1093 = vpop.f32.mrb[0].mxu0
        %v1094 = vpop.f32.mrb[0].mxu0
        %v1095 = vpop.f32.mrb[0].mxu0
        %1096 = vdwg.mxu0
        %v1097 = vsel %vm571, %v1092, -inf
        %1098 = vmax.xlane.f32.xlu0 %v1097
        %v1099 = vpop.xlane.xlu0 %1098
        %v1100 = vsub.f32 %v1092, %v1099
        %v1101 = vmul.f32 %v1100, 1.442695
        %v1102 = vpow.pop %v1101
        %v1103 = vsel %vm571, %v1102, 0.0
        %1104 = vadd.xlane.f32.xlu0 %v1103
        %v1105 = vpop.xlane.xlu0 %1104
        %v1106 = vpack.c.bf16 %v1102, %v1102
        %1107 = vrot.lane.b32.xlu0 %v568, 40
        %v1108 = vpop.permute.xlu0 %1107
        %v1110 = vsel %vm571, %v1106, 0
        %v1113 = vsel %vm633, %v1108, 0
        %1115 = vmatprep.subr.bf16.mxu0 0
        %1116 = vmatpush1.bf16.msra.mxu0 %v1113
        %1117 = vmatprep.subr.bf16.mxu0 0
        %1118 = vmatpush1.bf16.msra.mxu0 0
        %1119 = vmatprep.subr.bf16.mxu0 0
        %1120 = vmatpush1.bf16.msra.mxu0 0
        %1121 = vmatprep.subr.bf16.mxu0 0
        %1122 = vmatpush1.bf16.msra.mxu0 0
        %1123 = vmatprep.subr.bf16.mxu0 0
        %1124 = vmatpush1.bf16.msra.mxu0 0
        %1125 = vmatprep.subr.bf16.mxu0 0
        %1126 = vmatpush1.bf16.msra.mxu0 0
        %1127 = vmatprep.subr.bf16.mxu0 0
        %1128 = vmatpush1.bf16.msra.mxu0 0
        %1129 = vmatprep.subr.bf16.mxu0 0
        %1130 = vmatpush1.bf16.msra.mxu0 0
        %1131 = vmatprep.subr.bf16.mxu0 0
        %1132 = vmatpush1.bf16.msra.mxu0 0
        %1133 = vmatprep.subr.bf16.mxu0 0
        %1134 = vmatpush1.bf16.msra.mxu0 0
        %1135 = vmatprep.subr.bf16.mxu0 0
        %1136 = vmatpush1.bf16.msra.mxu0 0
        %1137 = vmatprep.subr.bf16.mxu0 0
        %1138 = vmatpush1.bf16.msra.mxu0 0
        %1139 = vmatprep.subr.bf16.mxu0 0
        %1140 = vmatpush1.bf16.msra.mxu0 0
        %1141 = vmatprep.subr.bf16.mxu0 0
        %1142 = vmatpush1.bf16.msra.mxu0 0
        %1143 = vmatprep.subr.bf16.mxu0 0
        %1144 = vmatpush1.bf16.msra.mxu0 0
        %1145 = vmatprep.subr.bf16.mxu0 0
        %1146 = vmatpush1.bf16.msra.mxu0 0
        %1147 = vmatprep.mubr.bf16.mxu0 0
        %1148 = vmatmul.mubr.bf16.gmra.mrb[0].mxu0 %v1110
        %v1149 = vpop.f32.mrb[0].mxu0
        %v1150 = vadd.f32 0.0, %v1149
        %v1151 = vpop.f32.mrb[0].mxu0
        %v1152 = vpop.f32.mrb[0].mxu0
        %v1153 = vpop.f32.mrb[0].mxu0
        %1154 = vdwg.mxu0
        %v1155 = vrcp.pop %v1105
        %v1156 = vmul.f32 %v1150, %v1155
        %v1157 = vpack.c.bf16 %v1156, %v1156
        %v1158 = vld [vmem:[%s5 + $0xc] sm:$0xf]
        %v1160 = vsel %vm571, %v1157, 0
        %v1163 = vsel %vm633, %v1158, 0
        %1165 = vmatprep.subr.bf16.mxu0 0
        %1166 = vmatpush1.bf16.msra.mxu0 %v1163
        %1167 = vmatprep.subr.bf16.mxu0 0
        %1168 = vmatpush1.bf16.msra.mxu0 0
        %1169 = vmatprep.subr.bf16.mxu0 0
        %1170 = vmatpush1.bf16.msra.mxu0 0
        %1171 = vmatprep.subr.bf16.mxu0 0
        %1172 = vmatpush1.bf16.msra.mxu0 0
        %1173 = vmatprep.subr.bf16.mxu0 0
        %1174 = vmatpush1.bf16.msra.mxu0 0
        %1175 = vmatprep.subr.bf16.mxu0 0
        %1176 = vmatpush1.bf16.msra.mxu0 0
        %1177 = vmatprep.subr.bf16.mxu0 0
        %1178 = vmatpush1.bf16.msra.mxu0 0
        %1179 = vmatprep.subr.bf16.mxu0 0
        %1180 = vmatpush1.bf16.msra.mxu0 0
        %1181 = vmatprep.subr.bf16.mxu0 0
        %1182 = vmatpush1.bf16.msra.mxu0 0
        %1183 = vmatprep.subr.bf16.mxu0 0
        %1184 = vmatpush1.bf16.msra.mxu0 0
        %1185 = vmatprep.subr.bf16.mxu0 0
        %1186 = vmatpush1.bf16.msra.mxu0 0
        %1187 = vmatprep.subr.bf16.mxu0 0
        %1188 = vmatpush1.bf16.msra.mxu0 0
        %1189 = vmatprep.subr.bf16.mxu0 0
        %1190 = vmatpush1.bf16.msra.mxu0 0
        %1191 = vmatprep.subr.bf16.mxu0 0
        %1192 = vmatpush1.bf16.msra.mxu0 0
        %1193 = vmatprep.subr.bf16.mxu0 0
        %1194 = vmatpush1.bf16.msra.mxu0 0
        %1195 = vmatprep.subr.bf16.mxu0 0
        %1196 = vmatpush1.bf16.msra.mxu0 0
        %1197 = vmatprep.mubr.bf16.mxu0 0
        %1198 = vmatmul.mubr.bf16.gmra.mrb[0].mxu0 %v1160
        %v1199 = vpop.f32.mrb[0].mxu0
        %v1200 = vadd.f32 0.0, %v1199
        %v1201 = vpop.f32.mrb[0].mxu0
        %v1202 = vpop.f32.mrb[0].mxu0
        %v1203 = vpop.f32.mrb[0].mxu0
        %1204 = vdwg.mxu0
        %v1205 = vadd.f32 %v1046, %v1200
        %v1206 = vld [vmem:[%s6] sm:$0x1]
        %v1208 = vlaneseq
        %v1209 = vshrl.u32 %v1208, 7
        %v1210 = vsub.s32 0, %v1209
        %v1211 = vrot.slane %v1206, %v1210
        %v1213 = vadd.f32 %v1205, %v1211
        %v1214 = vadd.f32 %v559, %v1213
        %v1215 = vld [vmem:[%s7] sm:$0x1]
        %v1216 = vld [vmem:[%s8] sm:$0x1]
        %vm1217 = vcmask 261120
        %v1218 = vsel %vm1217, %v1214, 0.0
        %1219 = vadd.xlane.f32.xlu0 %v1218
        %v1220 = vpop.xlane.xlu0 %1219
        %v1221 = vrcp.pop 32.0
        %v1222 = vmul.f32 %v1220, %v1221
        %v1223 = vsub.f32 %v1214, %v1222
        %v1224 = vmul.f32 %v1223, %v1223
        %v1225 = vsel %vm1217, %v1224, 0.0
        %1226 = vadd.xlane.f32.xlu0 %v1225
        %v1227 = vpop.xlane.xlu0 %1226
        %v1228 = vmul.f32 %v1227, %v1221
        %v1229 = vadd.f32 %v1228, 1e-05
        %v1230 = vrsqrt.pop %v1229
        %v1231 = vmul.f32 %v1223, %v1230
        %v1233 = vlaneseq
        %v1234 = vshrl.u32 %v1233, 7
        %v1235 = vsub.s32 0, %v1234
        %v1236 = vrot.slane %v1215, %v1235
        %v1238 = vmul.f32 %v1231, %v1236
        %v1240 = vlaneseq
        %v1241 = vshrl.u32 %v1240, 7
        %v1242 = vsub.s32 0, %v1241
        %v1243 = vrot.slane %v1216, %v1242
        %v1245 = vadd.f32 %v1238, %v1243
        %v1246 = vpack.c.bf16 %v1245, %v1245
        %v1247 = vld [vmem:[%s9] sm:$0xf]
        %v1248 = vld [vmem:[%s9 + $0x4] sm:$0xf]
        %v1249 = vld [vmem:[%s9 + $0x8] sm:$0xf]
        %v1250 = vld [vmem:[%s9 + $0xc] sm:$0xf]
        %v1251 = vld [vmem:[%s10] sm:$0x1]
        %v1253 = vlaneseq
        %v1254 = vshrl.u32 %v1253, 7
        %v1255 = vsub.s32 0, %v1254
        %v1256 = vrot.slane %v1251, %v1255
        %v1262 = vunpack.c.l.b16 %v1247
        %v1263 = vunpack.c.l.b16 %v1248
        %v1264 = vunpack.c.l.b16 %v1249
        %v1265 = vunpack.c.l.b16 %v1250
        %v1266 = vpack.c.b16 %v1263, %v1262
        %v1267 = vpack.c.b16 %v1265, %v1264
        %v1271 = vsel %vm1217, %v1246, 0
        %1273 = vmatprep.subr.bf16.mxu0 0
        %1274 = vmatpush1.bf16.msra.mxu0 %v1266
        %1275 = vmatprep.subr.bf16.mxu0 0
        %1276 = vmatpush1.bf16.msra.mxu0 %v1267
        %1277 = vmatprep.subr.bf16.mxu0 0
        %1278 = vmatpush1.bf16.msra.mxu0 0
        %1279 = vmatprep.subr.bf16.mxu0 0
        %1280 = vmatpush1.bf16.msra.mxu0 0
        %1281 = vmatprep.subr.bf16.mxu0 0
        %1282 = vmatpush1.bf16.msra.mxu0 0
        %1283 = vmatprep.subr.bf16.mxu0 0
        %1284 = vmatpush1.bf16.msra.mxu0 0
        %1285 = vmatprep.subr.bf16.mxu0 0
        %1286 = vmatpush1.bf16.msra.mxu0 0
        %1287 = vmatprep.subr.bf16.mxu0 0
        %1288 = vmatpush1.bf16.msra.mxu0 0
        %1289 = vmatprep.subr.bf16.mxu0 0
        %1290 = vmatpush1.bf16.msra.mxu0 0
        %1291 = vmatprep.subr.bf16.mxu0 0
        %1292 = vmatpush1.bf16.msra.mxu0 0
        %1293 = vmatprep.subr.bf16.mxu0 0
        %1294 = vmatpush1.bf16.msra.mxu0 0
        %1295 = vmatprep.subr.bf16.mxu0 0
        %1296 = vmatpush1.bf16.msra.mxu0 0
        %1297 = vmatprep.subr.bf16.mxu0 0
        %1298 = vmatpush1.bf16.msra.mxu0 0
        %1299 = vmatprep.subr.bf16.mxu0 0
        %1300 = vmatpush1.bf16.msra.mxu0 0
        %1301 = vmatprep.subr.bf16.mxu0 0
        %1302 = vmatpush1.bf16.msra.mxu0 0
        %1303 = vmatprep.subr.bf16.mxu0 0
        %1304 = vmatpush1.bf16.msra.mxu0 0
        %1305 = vmatprep.mubr.bf16.mxu0 0
        %1306 = vmatmul.mubr.bf16.gmra.mrb[0].mxu0 %v1271
        %v1307 = vpop.f32.mrb[0].mxu0
        %v1308 = vadd.f32 %v1256, %v1307
        %v1309 = vpop.f32.mrb[0].mxu0
        %v1310 = vpop.f32.mrb[0].mxu0
        %v1311 = vpop.f32.mrb[0].mxu0
        %1312 = vdwg.mxu0
        %v1313 = vmul.f32 %v1308, 0.5
        %v1314 = vmul.f32 %v1308, 0.70710677
        %v1315 = verf.f32.pop %v1314
        %v1316 = vadd.f32 %v1315, 1.0
        %v1317 = vmul.f32 %v1313, %v1316
        %v1318 = vpack.c.bf16 %v1317, %v1317
        %v1319 = vld [vmem:[%s11] sm:$0xf]
        %v1320 = vld [vmem:[%s11 + $0x4] sm:$0xf]
        %v1321 = vld [vmem:[%s11 + $0x8] sm:$0xf]
        %v1322 = vld [vmem:[%s11 + $0xc] sm:$0xf]
        %v1323 = vld [vmem:[%s11 + $0x10] sm:$0xf]
        %v1324 = vld [vmem:[%s11 + $0x14] sm:$0xf]
        %v1325 = vld [vmem:[%s11 + $0x18] sm:$0xf]
        %v1326 = vld [vmem:[%s11 + $0x1c] sm:$0xf]
        %v1327 = vld [vmem:[%s11 + $0x20] sm:$0xf]
        %v1328 = vld [vmem:[%s11 + $0x24] sm:$0xf]
        %v1329 = vld [vmem:[%s11 + $0x28] sm:$0xf]
        %v1330 = vld [vmem:[%s11 + $0x2c] sm:$0xf]
        %v1331 = vld [vmem:[%s11 + $0x30] sm:$0xf]
        %v1332 = vld [vmem:[%s11 + $0x34] sm:$0xf]
        %v1333 = vld [vmem:[%s11 + $0x38] sm:$0xf]
        %v1334 = vld [vmem:[%s11 + $0x3c] sm:$0xf]
        %v1335 = vld [vmem:[%s12] sm:$0x1]
        %v1337 = vlaneseq
        %v1338 = vshrl.u32 %v1337, 7
        %v1339 = vsub.s32 0, %v1338
        %v1340 = vrot.slane %v1335, %v1339
        %v1358 = vunpack.c.l.b16 %v1319
        %v1359 = vunpack.c.l.b16 %v1320
        %v1360 = vunpack.c.l.b16 %v1321
        %v1361 = vunpack.c.l.b16 %v1322
        %v1362 = vunpack.c.l.b16 %v1323
        %v1363 = vunpack.c.l.b16 %v1324
        %v1364 = vunpack.c.l.b16 %v1325
        %v1365 = vunpack.c.l.b16 %v1326
        %v1366 = vunpack.c.l.b16 %v1327
        %v1367 = vunpack.c.l.b16 %v1328
        %v1368 = vunpack.c.l.b16 %v1329
        %v1369 = vunpack.c.l.b16 %v1330
        %v1370 = vunpack.c.l.b16 %v1331
        %v1371 = vunpack.c.l.b16 %v1332
        %v1372 = vunpack.c.l.b16 %v1333
        %v1373 = vunpack.c.l.b16 %v1334
        %v1374 = vpack.c.b16 %v1359, %v1358
        %v1375 = vpack.c.b16 %v1361, %v1360
        %v1376 = vpack.c.b16 %v1363, %v1362
        %v1377 = vpack.c.b16 %v1365, %v1364
        %v1378 = vpack.c.b16 %v1367, %v1366
        %v1379 = vpack.c.b16 %v1369, %v1368
        %v1380 = vpack.c.b16 %v1371, %v1370
        %v1381 = vpack.c.b16 %v1373, %v1372
        %1390 = vmatprep.subr.bf16.mxu0 0
        %1391 = vmatpush1.bf16.msra.mxu0 %v1374
        %1392 = vmatprep.subr.bf16.mxu0 0
        %1393 = vmatpush1.bf16.msra.mxu0 %v1375
        %1394 = vmatprep.subr.bf16.mxu0 0
        %1395 = vmatpush1.bf16.msra.mxu0 %v1376
        %1396 = vmatprep.subr.bf16.mxu0 0
        %1397 = vmatpush1.bf16.msra.mxu0 %v1377
        %1398 = vmatprep.subr.bf16.mxu0 0
        %1399 = vmatpush1.bf16.msra.mxu0 %v1378
        %1400 = vmatprep.subr.bf16.mxu0 0
        %1401 = vmatpush1.bf16.msra.mxu0 %v1379
        %1402 = vmatprep.subr.bf16.mxu0 0
        %1403 = vmatpush1.bf16.msra.mxu0 %v1380
        %1404 = vmatprep.subr.bf16.mxu0 0
        %1405 = vmatpush1.bf16.msra.mxu0 %v1381
        %1406 = vmatprep.subr.bf16.mxu0 0
        %1407 = vmatpush1.bf16.msra.mxu0 0
        %1408 = vmatprep.subr.bf16.mxu0 0
        %1409 = vmatpush1.bf16.msra.mxu0 0
        %1410 = vmatprep.subr.bf16.mxu0 0
        %1411 = vmatpush1.bf16.msra.mxu0 0
        %1412 = vmatprep.subr.bf16.mxu0 0
        %1413 = vmatpush1.bf16.msra.mxu0 0
        %1414 = vmatprep.subr.bf16.mxu0 0
        %1415 = vmatpush1.bf16.msra.mxu0 0
        %1416 = vmatprep.subr.bf16.mxu0 0
        %1417 = vmatpush1.bf16.msra.mxu0 0
        %1418 = vmatprep.subr.bf16.mxu0 0
        %1419 = vmatpush1.bf16.msra.mxu0 0
        %1420 = vmatprep.subr.bf16.mxu0 0
        %1421 = vmatpush1.bf16.msra.mxu0 0
        %1422 = vmatprep.mubr.bf16.mxu0 0
        %1423 = vmatmul.mubr.bf16.gmra.mrb[0].mxu0 %v1318
        %v1424 = vpop.f32.mrb[0].mxu0
        %v1425 = vadd.f32 %v1340, %v1424
        %v1426 = vpop.f32.mrb[0].mxu0
        %v1427 = vpop.f32.mrb[0].mxu0
        %v1428 = vpop.f32.mrb[0].mxu0
        %1429 = vdwg.mxu0
        %v1430 = vadd.f32 %v1214, %v1425
        %1431 = vst.msk [vmem:[%s445] sm:$0xff] %vm1217, %v1430
        %s1432 = sand.u32 %s327, 1
        %s1433 = scalar_lea.sflag [#allocation4], %s1432
        %s1434 = sand.u32 %s327, 1
        %s1435 = smul.addr %s1434, 8
        %s1436 = scalar_lea.vmem [#allocation3], %s1435
        // Predicated region
        $region77: #{tpu_custom_call.1} parent=71 // pred_check
          %p1437 = pneg %p337
        $region78: #{tpu_custom_call.1} parent=71 // pred_check_branch
          %1439 = sbr.rel (%p1437) target = $region80
        $region79: #{tpu_custom_call.1} parent=71 // pred_region
          %s1441 = ssub.s32 128, 128
          %1442 = vsyncadd %s1433, %s1441
          %s1443 = sadd.s32 %s32, %s31
          %s1444 = smul.addr %s1443, 128
          %s1445 = scalar_lea.hbm %s13, %s1444
          %s1447 = sshll.u32 %s1436, 4
          %s1448 = int_to_ptr.vmem [resolvable:$true] %s1447
          %1450 = dma.vmem_to_hbm [thread:$0]  %s1448, 128, %s1445, %s1433
        $region80: #{tpu_custom_call.1} parent=71 // pred_fallthru
          _
      $region72: #{tpu_custom_call.1} parent=5 // pred_fallthru
        _
      %p1451 = scmp.le.s32.totalorder 2, %s22
      // Predicated region
      $region81: #{tpu_custom_call.1} parent=5 // pred_check
        %p1452 = pneg %p1451
      $region82: #{tpu_custom_call.1} parent=5 // pred_check_branch
        %1454 = sbr.rel (%p1452) target = $region84
      $region83: #{tpu_custom_call.1} parent=5 // pred_region
        %s1455 = ssub.s32 %s22, 2
        // Predicated region
        $region85: #{tpu_custom_call.1} parent=83 // pred_check
          %p1456 = pneg %p343
        $region86: #{tpu_custom_call.1} parent=83 // pred_check_branch
          %1458 = sbr.rel (%p1456) target = $region88
        $region87: #{tpu_custom_call.1} parent=83 // pred_region
          %s1459 = sand.u32 %s328, 1
          %s1460 = scalar_lea.sflag [#allocation4], %s1459
          %s1461 = sand.u32 %s328, 1
          %s1462 = smul.addr %s1461, 8
          %s1463 = scalar_lea.vmem [#allocation3], %s1462
          %1464 = dma.done %s1460, 128
        $region88: #{tpu_custom_call.1} parent=83 // pred_fallthru
          _
      $region84: #{tpu_custom_call.1} parent=5 // pred_fallthru
        _
    $region6: #{tpu_custom_call.1} parent=1 // loop_footer
      %s26 = sadd.s32 1, %s22
    $region7: #{tpu_custom_call.1} parent=1 // loop_footer_branch
      %21 = sbr.rel target = $region3
    $region8: #{tpu_custom_call.1} parent=1 // loop_exit
      _
    %1465 = vsyncpa [#allocation4], 1
    %s1466 = scalar_lea.sflag [#allocation4], 1
    %1467 = vsyncpa %s1466, 1

</llo_original>
